<compile_context>
chip_gen: v6e
topology: v6e:2x2x1
jax: 0.10.0
libtpu: 0.0.40
codegen_flags: <defaults>
</compile_context>

<pallas_src>
import jax
import jax.numpy as jnp
from jax import lax
from jax.experimental import pallas as pl
from jax.experimental.pallas import tpu as pltpu


# ----------------------------------------------------------------------------
# Fused kernel: all QRNN layers + final Linear for one (batch tile, time chunk).
# ----------------------------------------------------------------------------
def _build_fused_qrnn_kernel(num_layers, kernel_size, chunk_len, hidden_size,
                             batch_tile, dense):
    L, k, Tc, H, Bt = num_layers, kernel_size, chunk_len, hidden_size, batch_tile

    def kernel(*refs):
        # refs = (x, w_0, b_0, ..., w_{L-1}, b_{L-1}, lin_w, lin_b, out, *scratch)
        n_in = 1 + 2 * L + 2
        x_ref = refs[0]
        lin_w_ref = refs[n_in - 2]
        lin_b_ref = refs[n_in - 1]
        out_ref = refs[n_in]
        scratch = refs[n_in + 1:]

        t = pl.program_id(1)
        t_last = pl.num_programs(1) - 1

        x = x_ref[...].astype(jnp.float32)            # (Bt, Tc, C0); gates in f32

        if L > 0:
            # Local-time index used to mask the wrapped entries of the rolls.
            t_idx = lax.broadcasted_iota(jnp.int32, (Bt, Tc, H), 1)

        si = 0
        for li in range(L):
            w_ref = refs[1 + 2 * li]                  # (k*C, 3H) bf16, z|f|o fused
            b_ref = refs[2 + 2 * li]                  # (1, 3H) f32
            C = x.shape[-1]

            hist_ref = None
            if k > 1:
                hist_ref = scratch[si]                # (Bt, k-1, C) f32
                si += 1
            carry_ref = scratch[si]                   # (Bt, 1, H) f32
            si += 1

            @pl.when(t == 0)
            def _init(h_ref=hist_ref, c_ref=carry_ref):
                if h_ref is not None:
                    h_ref[...] = jnp.zeros_like(h_ref)
                c_ref[...] = jnp.zeros_like(c_ref)

            # --- causal conv: prepend carried last k-1 rows of previous chunk,
            #     then accumulate k tap-matmuls (no k-wide im2col copy). --------
            if k > 1:
                prev_rows = hist_ref[...]                          # (Bt, k-1, C)
                x_ext = jnp.concatenate([prev_rows, x], axis=1)    # (Bt, Tc+k-1, C)
                hist_ref[...] = x[:, Tc - (k - 1):, :]             # carry for next chunk
            else:
                x_ext = x
            xb = x_ext.astype(jnp.bfloat16)                        # MXU inputs in bf16
            pre = None
            for j in range(k):                        # tap j reads x[t - (k-1-j)]
                xj = xb[:, j:j + Tc, :].reshape(Bt * Tc, C)
                pj = jnp.dot(xj, w_ref[j * C:(j + 1) * C, :],
                             preferred_element_type=jnp.float32)
                pre = pj if pre is None else pre + pj
            pre = (pre + b_ref[...]).reshape(Bt, Tc, 3 * H)

            z = jnp.tanh(pre[:, :, 0:H])
            # eval-mode zoneout: f = 1 - dropout(1 - sigmoid(.)) == sigmoid(.)
            f = jax.nn.sigmoid(pre[:, :, H:2 * H])
            o = jax.nn.sigmoid(pre[:, :, 2 * H:3 * H])

            # --- 'fo' pooling: c_t = f_t*c_{t-1} + (1-f_t)*z_t -----------------
            # Chunked first-order linear recurrence: log-depth Hillis-Steele
            # prefix of the per-step affine maps inside this chunk (XLU roll +
            # VPU mask, no concat copies), then apply the carried c once.
            a = f                                     # multiplicative part
            b = (1.0 - f) * z                         # additive part

            def shifted(v, d, fill):
                r = pltpu.roll(v.reshape(Bt * Tc, H), shift=d, axis=0)
                return jnp.where(t_idx >= d, r.reshape(Bt, Tc, H), fill)

            d = 1
            while d < Tc:
                b = a * shifted(b, d, 0.0) + b
                a = a * shifted(a, d, 1.0)
                d *= 2
            c = a * carry_ref[...] + b                # carry broadcasts over Tc
            carry_ref[...] = c[:, Tc - 1:Tc, :]
            h = o * c                                 # (Bt, Tc, H) f32

            x = jnp.concatenate([h, x], axis=-1) if dense else h

        # --- classifier only on the last time chunk; only logits hit HBM ------
        @pl.when(t == t_last)
        def _classify(x=x):
            last = x[:, Tc - 1, :].astype(jnp.bfloat16)            # (Bt, C_out)
            logits = jnp.dot(last, lin_w_ref[...],
                             preferred_element_type=jnp.float32) + lin_b_ref[...]
            out_ref[...] = logits.reshape(out_ref.shape)

    return kernel


# ----------------------------------------------------------------------------
# Wrapper: one pallas_call for the whole forward pass.
# ----------------------------------------------------------------------------
def qrnn_forward(tokens, params, kernel_size, dense=False,
                 time_chunk=None, batch_tile=None):
    """tokens: (B, T) int32 -> logits (B, n_classes).  Eval-mode forward."""
    # TODO(synk): train-mode nn.Dropout / zoneout randomness not modeled (eval
    # mode only); the embedding gather is left to XLA.
    x = jnp.take(params["embedding"], tokens, axis=0)              # (B, T, E)
    x = x.astype(jnp.bfloat16)                                     # halve input DMA
    B, T, E = x.shape
    layers = params["layers"]
    L = len(layers)
    H = layers[0]["w"].shape[-1] // 3 if L else 0
    C_fin, N = params["linear_w"].shape
    k = kernel_size

    # Batch tile: keep >= 2 "parallel" grid steps when possible so v7x's two
    # TensorCores both get work.  The time axis carries state -> "arbitrary".
    if batch_tile is None:
        batch_tile = next((d for d in (8, 4, 2, 1) if B % d == 0 and B // d >= 2), B)
    Bt = batch_tile
    assert B % Bt == 0, "batch must tile evenly"

    if time_chunk is None:
        time_chunk = min(T, 128)
    Tc = time_chunk
    assert T % Tc == 0, "seq len must be a multiple of the time chunk"
    assert Tc % 16 == 0, "time chunk must be a multiple of 16 (bf16 sublanes)"
    assert Tc >= k - 1, "time chunk must cover the conv history"

    kernel = _build_fused_qrnn_kernel(L, k, Tc, H, Bt, dense)

    in_specs = [pl.BlockSpec((Bt, Tc, E), lambda b, t: (b, t, 0))]
    operands = [x]
    scratch_shapes = []
    C = E
    for lp in layers:
        kc, th = lp["w"].shape
        in_specs.append(pl.BlockSpec((kc, th), lambda b, t: (0, 0)))
        in_specs.append(pl.BlockSpec((1, th), lambda b, t: (0, 0)))
        operands += [lp["w"].astype(jnp.bfloat16), lp["b"]]
        if k > 1:
            scratch_shapes.append(pltpu.VMEM((Bt, k - 1, C), jnp.float32))
        scratch_shapes.append(pltpu.VMEM((Bt, 1, H), jnp.float32))
        C = C + H if dense else H
    assert C == C_fin, "linear in_features mismatch"
    in_specs.append(pl.BlockSpec((C_fin, N), lambda b, t: (0, 0)))
    in_specs.append(pl.BlockSpec((1, N), lambda b, t: (0, 0)))
    operands += [params["linear_w"].astype(jnp.bfloat16), params["linear_b"]]

    out = pl.pallas_call(
        kernel,
        out_shape=jax.ShapeDtypeStruct((B, 1, N), jnp.float32),
        grid_spec=pltpu.PrefetchScalarGridSpec(
            num_scalar_prefetch=0,
            grid=(B // Bt, T // Tc),
            in_specs=in_specs,
            out_specs=pl.BlockSpec((Bt, 1, N), lambda b, t: (b, 0, 0)),
            scratch_shapes=scratch_shapes,
        ),
        compiler_params=pltpu.CompilerParams(
            dimension_semantics=("parallel", "arbitrary"),
            vmem_limit_bytes=32 * 1024 * 1024),
    )(*operands)
    return out[:, 0, :]


# ----------------------------------------------------------------------------
# Pure-JAX f32 reference for correctness check (mirrors the torch module).
# ----------------------------------------------------------------------------
def _qrnn_layer_ref(x, w, b, k, H):
    B, T, C = x.shape
    xpad = jnp.concatenate([jnp.zeros((B, k - 1, C), x.dtype), x], axis=1)
    w3 = w.reshape(k, C, 3 * H)
    pre = jnp.zeros((B, T, 3 * H), jnp.float32)
    for j in range(k):
        pre = pre + jnp.einsum("btc,ch->bth", xpad[:, j:j + T, :], w3[j])
    pre = pre + b
    z = jnp.tanh(pre[..., 0:H])
    f = jax.nn.sigmoid(pre[..., H:2 * H])
    o = jax.nn.sigmoid(pre[..., 2 * H:])

    def step(c_prev, zfo):
        z_t, f_t, o_t = zfo
        c_t = f_t * c_prev + (1.0 - f_t) * z_t
        return c_t, o_t * c_t

    zs, fs, os_ = (jnp.swapaxes(g, 0, 1) for g in (z, f, o))
    _, h = lax.scan(step, jnp.zeros((B, H), jnp.float32), (zs, fs, os_))
    return jnp.swapaxes(h, 0, 1)


def qrnn_forward_ref(tokens, params, kernel_size, dense=False):
    x = jnp.take(params["embedding"], tokens, axis=0)
    H = params["layers"][0]["w"].shape[-1] // 3 if params["layers"] else 0
    for lp in params["layers"]:
        residual = x
        h = _qrnn_layer_ref(x, lp["w"], lp["b"], kernel_size, H)
        x = jnp.concatenate([h, residual], axis=-1) if dense else h
    last = x[:, -1, :]
    return last @ params["linear_w"] + params["linear_b"]


# ----------------------------------------------------------------------------
# Deterministic parameter init (shapes from the torch module's __init__).
# Per layer the three Conv1d weights (H, C, k) are stored FUSED as (k*C, 3H):
#   rows j*C:(j+1)*C == tap-j weights, columns [0:H|H:2H|2H:3H] == z|f|o gates.
# ----------------------------------------------------------------------------
def init_params(key, vocab_size, embed_size, hidden_size, num_layers,
                kernel_size, n_classes, dense=False):
    def nrm(k_, shape, scale=0.1):
        return scale * jax.random.normal(k_, shape, jnp.float32)

    n_qrnn = max(num_layers - 1, 0)
    keys = iter(jax.random.split(key, 3 + 2 * n_qrnn))
    params = {"embedding": nrm(next(keys), (vocab_size, embed_size), 1.0),
              "layers": []}
    input_size = embed_size
    for _ in range(n_qrnn):
        params["layers"].append({
            "w": nrm(next(keys), (kernel_size * input_size, 3 * hidden_size)),
            "b": nrm(next(keys), (1, 3 * hidden_size)),
        })
        input_size = input_size + hidden_size if dense else hidden_size
    params["linear_w"] = nrm(next(keys), (input_size, n_classes))
    params["linear_b"] = nrm(next(keys), (1, n_classes))
    return params


if __name__ == "__main__":
    B, T = 4, 64
    vocab_size, embed_size, hidden_size = 50, 32, 32
    num_layers, kernel_size, n_classes = 3, 2, 5   # num_layers-1 = 2 QRNN layers

    key = jax.random.PRNGKey(0)
    pkey, tkey = jax.random.split(key)
    tokens = jax.random.randint(tkey, (B, T), 0, vocab_size)

    for dense in (False, True):
        params = init_params(pkey, vocab_size, embed_size, hidden_size,
                             num_layers, kernel_size, n_classes, dense)
        # time_chunk=16 -> 4 time chunks per batch tile: exercises the carried
        # conv history and the c carry across chunks; 2 parallel batch steps.
        out = qrnn_forward(tokens, params, kernel_size, dense, time_chunk=16)
        out = jax.block_until_ready(out)
        ref = qrnn_forward_ref(tokens, params, kernel_size, dense)
        assert out.shape == (B, n_classes)
        # bf16 MXU inputs vs. the f32 reference -> loose-ish tolerance.
        assert jnp.allclose(out, ref, rtol=5e-2, atol=5e-2), (dense, out, ref)

    print("KERNEL_OK")
</pallas_src>

<mosaic_0001>
module attributes {stable_mosaic.version = 11 : i64} {
  func.func @kernel(%arg0: i32, %arg1: i32, %arg2: memref<2x16x32xbf16, #tpu.memory_space<vmem>>, %arg3: memref<64x96xbf16, #tpu.memory_space<vmem>>, %arg4: memref<1x96xf32, #tpu.memory_space<vmem>>, %arg5: memref<64x96xbf16, #tpu.memory_space<vmem>>, %arg6: memref<1x96xf32, #tpu.memory_space<vmem>>, %arg7: memref<32x5xbf16, #tpu.memory_space<vmem>>, %arg8: memref<1x5xf32, #tpu.memory_space<vmem>>, %arg9: memref<2x1x5xf32, #tpu.memory_space<vmem>>, %arg10: memref<2x1x32xf32, #tpu.memory_space<vmem>>, %arg11: memref<2x1x32xf32, #tpu.memory_space<vmem>>, %arg12: memref<2x1x32xf32, #tpu.memory_space<vmem>>, %arg13: memref<2x1x32xf32, #tpu.memory_space<vmem>>) attributes {dimension_semantics = [#tpu.dimension_semantics<parallel>, #tpu.dimension_semantics<arbitrary>], iteration_bounds = array<i64: 2, 4>, scalar_prefetch = 0 : i64, scratch_operands = 4 : i64, tpu.core_type = #tpu.core_type<tc>, window_params = [{transform_indices = @transform_0, window_bounds = array<i64: 2, 16, 32>}, {pipeline_mode = #tpu.pipeline_mode<synchronous>, transform_indices = @transform_1, window_bounds = array<i64: 64, 96>}, {pipeline_mode = #tpu.pipeline_mode<synchronous>, transform_indices = @transform_2, window_bounds = array<i64: 1, 96>}, {pipeline_mode = #tpu.pipeline_mode<synchronous>, transform_indices = @transform_3, window_bounds = array<i64: 64, 96>}, {pipeline_mode = #tpu.pipeline_mode<synchronous>, transform_indices = @transform_4, window_bounds = array<i64: 1, 96>}, {pipeline_mode = #tpu.pipeline_mode<synchronous>, transform_indices = @transform_5, window_bounds = array<i64: 32, 5>}, {pipeline_mode = #tpu.pipeline_mode<synchronous>, transform_indices = @transform_6, window_bounds = array<i64: 1, 5>}, {transform_indices = @transform_7, window_bounds = array<i64: 2, 1, 5>}]} {
    %c0 = arith.constant 0 : index
    %c0_0 = arith.constant 0 : index
    %c0_1 = arith.constant 0 : index
    %0 = vector.load %arg2[%c0, %c0_0, %c0_1] : memref<2x16x32xbf16, #tpu.memory_space<vmem>>, vector<2x16x32xbf16>
    %1 = arith.extf %0 : vector<2x16x32xbf16> to vector<2x16x32xf32>
    %2 = tpu.iota {dimensions = array<i32: 1>} : vector<2x16x32xi32>
    %c0_i32 = arith.constant 0 : i32
    %3 = arith.cmpi eq, %arg1, %c0_i32 : i32
    %4 = arith.extui %3 : i1 to i32
    %c0_i32_2 = arith.constant 0 : i32
    %5 = arith.cmpi ne, %4, %c0_i32_2 : i32
    scf.if %5 {
      %cst_94 = arith.constant 0.000000e+00 : f32
      %232 = vector.broadcast %cst_94 : f32 to vector<2x1x32xf32>
      %c0_95 = arith.constant 0 : index
      %c0_96 = arith.constant 0 : index
      %c0_97 = arith.constant 0 : index
      %233 = vector.load %arg10[%c0_95, %c0_96, %c0_97] : memref<2x1x32xf32, #tpu.memory_space<vmem>>, vector<2x1x32xf32>
      tpu.vector_store %arg10[%c0_95, %c0_96, %c0_97], %232 {strides = array<i32>} : memref<2x1x32xf32, #tpu.memory_space<vmem>>, vector<2x1x32xf32>,
      %cst_98 = arith.constant 0.000000e+00 : f32
      %234 = vector.broadcast %cst_98 : f32 to vector<2x1x32xf32>
      %c0_99 = arith.constant 0 : index
      %c0_100 = arith.constant 0 : index
      %c0_101 = arith.constant 0 : index
      %235 = vector.load %arg11[%c0_99, %c0_100, %c0_101] : memref<2x1x32xf32, #tpu.memory_space<vmem>>, vector<2x1x32xf32>
      tpu.vector_store %arg11[%c0_99, %c0_100, %c0_101], %234 {strides = array<i32>} : memref<2x1x32xf32, #tpu.memory_space<vmem>>, vector<2x1x32xf32>,
    } else {
    }
    %c0_3 = arith.constant 0 : index
    %c0_4 = arith.constant 0 : index
    %c0_5 = arith.constant 0 : index
    %6 = vector.load %arg10[%c0_3, %c0_4, %c0_5] : memref<2x1x32xf32, #tpu.memory_space<vmem>>, vector<2x1x32xf32>
    %7 = tpu.concatenate %6, %1 in 1 : vector<2x1x32xf32>, vector<2x16x32xf32> -> vector<2x17x32xf32>
    %8 = vector.extract_strided_slice %1 {offsets = [0, 15, 0], sizes = [2, 1, 32], strides = [1, 1, 1]} : vector<2x16x32xf32> to vector<2x1x32xf32>
    %c0_6 = arith.constant 0 : index
    %c0_7 = arith.constant 0 : index
    %c0_8 = arith.constant 0 : index
    %9 = vector.load %arg10[%c0_6, %c0_7, %c0_8] : memref<2x1x32xf32, #tpu.memory_space<vmem>>, vector<2x1x32xf32>
    tpu.vector_store %arg10[%c0_6, %c0_7, %c0_8], %8 {strides = array<i32>} : memref<2x1x32xf32, #tpu.memory_space<vmem>>, vector<2x1x32xf32>,
    %10 = arith.truncf %7 : vector<2x17x32xf32> to vector<2x17x32xbf16>
    %11 = vector.extract_strided_slice %10 {offsets = [0, 0, 0], sizes = [2, 16, 32], strides = [1, 1, 1]} : vector<2x17x32xbf16> to vector<2x16x32xbf16>
    %12 = vector.shape_cast %11 : vector<2x16x32xbf16> to vector<32x32xbf16>
    %c0_9 = arith.constant 0 : index
    %c0_10 = arith.constant 0 : index
    %13 = vector.load %arg3[%c0_9, %c0_10] : memref<64x96xbf16, #tpu.memory_space<vmem>>, vector<32x96xbf16>
    %cst = arith.constant dense<0.000000e+00> : vector<32x96xf32>
    %14 = tpu.matmul %12, %13, %cst {dimension_numbers = #tpu.dot_dimension_numbers<[1], [0], [0], [1], [0, 0, 1, 1], [], []>} : vector<32x32xbf16>, vector<32x96xbf16>, vector<32x96xf32> -> vector<32x96xf32>
    %15 = vector.extract_strided_slice %10 {offsets = [0, 1, 0], sizes = [2, 16, 32], strides = [1, 1, 1]} : vector<2x17x32xbf16> to vector<2x16x32xbf16>
    %16 = vector.shape_cast %15 : vector<2x16x32xbf16> to vector<32x32xbf16>
    %c32 = arith.constant 32 : index
    %c0_11 = arith.constant 0 : index
    %17 = vector.load %arg3[%c32, %c0_11] : memref<64x96xbf16, #tpu.memory_space<vmem>>, vector<32x96xbf16>
    %cst_12 = arith.constant dense<0.000000e+00> : vector<32x96xf32>
    %18 = tpu.matmul %16, %17, %cst_12 {dimension_numbers = #tpu.dot_dimension_numbers<[1], [0], [0], [1], [0, 0, 1, 1], [], []>} : vector<32x32xbf16>, vector<32x96xbf16>, vector<32x96xf32> -> vector<32x96xf32>
    %19 = arith.addf %14, %18 : vector<32x96xf32>
    %c0_13 = arith.constant 0 : index
    %c0_14 = arith.constant 0 : index
    %20 = vector.load %arg4[%c0_13, %c0_14] : memref<1x96xf32, #tpu.memory_space<vmem>>, vector<1x96xf32>
    %21 = vector.broadcast %20 : vector<1x96xf32> to vector<32x96xf32>
    %22 = arith.addf %19, %21 : vector<32x96xf32>
    %23 = vector.shape_cast %22 : vector<32x96xf32> to vector<2x16x96xf32>
    %24 = vector.extract_strided_slice %23 {offsets = [0, 0, 0], sizes = [2, 16, 32], strides = [1, 1, 1]} : vector<2x16x96xf32> to vector<2x16x32xf32>
    %25 = math.tanh %24 : vector<2x16x32xf32>
    %26 = vector.extract_strided_slice %23 {offsets = [0, 0, 32], sizes = [2, 16, 32], strides = [1, 1, 1]} : vector<2x16x96xf32> to vector<2x16x32xf32>
    %27 = arith.negf %26 : vector<2x16x32xf32>
    %28 = math.exp %27 : vector<2x16x32xf32>
    %cst_15 = arith.constant 1.000000e+00 : f32
    %29 = vector.broadcast %cst_15 : f32 to vector<2x16x32xf32>
    %30 = arith.addf %29, %28 : vector<2x16x32xf32>
    %31 = arith.divf %29, %30 : vector<2x16x32xf32>
    %32 = vector.extract_strided_slice %23 {offsets = [0, 0, 64], sizes = [2, 16, 32], strides = [1, 1, 1]} : vector<2x16x96xf32> to vector<2x16x32xf32>
    %33 = arith.negf %32 : vector<2x16x32xf32>
    %34 = math.exp %33 : vector<2x16x32xf32>
    %cst_16 = arith.constant 1.000000e+00 : f32
    %35 = vector.broadcast %cst_16 : f32 to vector<2x16x32xf32>
    %36 = arith.addf %35, %34 : vector<2x16x32xf32>
    %37 = arith.divf %35, %36 : vector<2x16x32xf32>
    %cst_17 = arith.constant 1.000000e+00 : f32
    %38 = vector.broadcast %cst_17 : f32 to vector<2x16x32xf32>
    %39 = arith.subf %38, %31 : vector<2x16x32xf32>
    %40 = arith.mulf %39, %25 : vector<2x16x32xf32>
    %41 = vector.shape_cast %40 : vector<2x16x32xf32> to vector<32x32xf32>
    %c1_i32 = arith.constant 1 : i32
    %42 = tpu.dynamic_rotate %41 by %c1_i32 dim 0 : vector<32x32xf32>, i32 -> vector<32x32xf32>
    %c1_i32_18 = arith.constant 1 : i32
    %43 = vector.broadcast %c1_i32_18 : i32 to vector<2x16x32xi32>
    %44 = arith.cmpi sge, %2, %43 : vector<2x16x32xi32>
    %45 = vector.shape_cast %42 : vector<32x32xf32> to vector<2x16x32xf32>
    %cst_19 = arith.constant 0.000000e+00 : f32
    %46 = vector.broadcast %cst_19 : f32 to vector<2x16x32xf32>
    %47 = arith.select %44, %45, %46 : vector<2x16x32xi1>, vector<2x16x32xf32>
    %48 = arith.mulf %31, %47 : vector<2x16x32xf32>
    %49 = arith.addf %48, %40 : vector<2x16x32xf32>
    %50 = vector.shape_cast %31 : vector<2x16x32xf32> to vector<32x32xf32>
    %c1_i32_20 = arith.constant 1 : i32
    %51 = tpu.dynamic_rotate %50 by %c1_i32_20 dim 0 : vector<32x32xf32>, i32 -> vector<32x32xf32>
    %c1_i32_21 = arith.constant 1 : i32
    %52 = vector.broadcast %c1_i32_21 : i32 to vector<2x16x32xi32>
    %53 = arith.cmpi sge, %2, %52 : vector<2x16x32xi32>
    %54 = vector.shape_cast %51 : vector<32x32xf32> to vector<2x16x32xf32>
    %cst_22 = arith.constant 1.000000e+00 : f32
    %55 = vector.broadcast %cst_22 : f32 to vector<2x16x32xf32>
    %56 = arith.select %53, %54, %55 : vector<2x16x32xi1>, vector<2x16x32xf32>
    %57 = arith.mulf %31, %56 : vector<2x16x32xf32>
    %58 = vector.shape_cast %49 : vector<2x16x32xf32> to vector<32x32xf32>
    %c2_i32 = arith.constant 2 : i32
    %59 = tpu.dynamic_rotate %58 by %c2_i32 dim 0 : vector<32x32xf32>, i32 -> vector<32x32xf32>
    %c2_i32_23 = arith.constant 2 : i32
    %60 = vector.broadcast %c2_i32_23 : i32 to vector<2x16x32xi32>
    %61 = arith.cmpi sge, %2, %60 : vector<2x16x32xi32>
    %62 = vector.shape_cast %59 : vector<32x32xf32> to vector<2x16x32xf32>
    %cst_24 = arith.constant 0.000000e+00 : f32
    %63 = vector.broadcast %cst_24 : f32 to vector<2x16x32xf32>
    %64 = arith.select %61, %62, %63 : vector<2x16x32xi1>, vector<2x16x32xf32>
    %65 = arith.mulf %57, %64 : vector<2x16x32xf32>
    %66 = arith.addf %65, %49 : vector<2x16x32xf32>
    %67 = vector.shape_cast %57 : vector<2x16x32xf32> to vector<32x32xf32>
    %c2_i32_25 = arith.constant 2 : i32
    %68 = tpu.dynamic_rotate %67 by %c2_i32_25 dim 0 : vector<32x32xf32>, i32 -> vector<32x32xf32>
    %c2_i32_26 = arith.constant 2 : i32
    %69 = vector.broadcast %c2_i32_26 : i32 to vector<2x16x32xi32>
    %70 = arith.cmpi sge, %2, %69 : vector<2x16x32xi32>
    %71 = vector.shape_cast %68 : vector<32x32xf32> to vector<2x16x32xf32>
    %cst_27 = arith.constant 1.000000e+00 : f32
    %72 = vector.broadcast %cst_27 : f32 to vector<2x16x32xf32>
    %73 = arith.select %70, %71, %72 : vector<2x16x32xi1>, vector<2x16x32xf32>
    %74 = arith.mulf %57, %73 : vector<2x16x32xf32>
    %75 = vector.shape_cast %66 : vector<2x16x32xf32> to vector<32x32xf32>
    %c4_i32 = arith.constant 4 : i32
    %76 = tpu.dynamic_rotate %75 by %c4_i32 dim 0 : vector<32x32xf32>, i32 -> vector<32x32xf32>
    %c4_i32_28 = arith.constant 4 : i32
    %77 = vector.broadcast %c4_i32_28 : i32 to vector<2x16x32xi32>
    %78 = arith.cmpi sge, %2, %77 : vector<2x16x32xi32>
    %79 = vector.shape_cast %76 : vector<32x32xf32> to vector<2x16x32xf32>
    %cst_29 = arith.constant 0.000000e+00 : f32
    %80 = vector.broadcast %cst_29 : f32 to vector<2x16x32xf32>
    %81 = arith.select %78, %79, %80 : vector<2x16x32xi1>, vector<2x16x32xf32>
    %82 = arith.mulf %74, %81 : vector<2x16x32xf32>
    %83 = arith.addf %82, %66 : vector<2x16x32xf32>
    %84 = vector.shape_cast %74 : vector<2x16x32xf32> to vector<32x32xf32>
    %c4_i32_30 = arith.constant 4 : i32
    %85 = tpu.dynamic_rotate %84 by %c4_i32_30 dim 0 : vector<32x32xf32>, i32 -> vector<32x32xf32>
    %c4_i32_31 = arith.constant 4 : i32
    %86 = vector.broadcast %c4_i32_31 : i32 to vector<2x16x32xi32>
    %87 = arith.cmpi sge, %2, %86 : vector<2x16x32xi32>
    %88 = vector.shape_cast %85 : vector<32x32xf32> to vector<2x16x32xf32>
    %cst_32 = arith.constant 1.000000e+00 : f32
    %89 = vector.broadcast %cst_32 : f32 to vector<2x16x32xf32>
    %90 = arith.select %87, %88, %89 : vector<2x16x32xi1>, vector<2x16x32xf32>
    %91 = arith.mulf %74, %90 : vector<2x16x32xf32>
    %92 = vector.shape_cast %83 : vector<2x16x32xf32> to vector<32x32xf32>
    %c8_i32 = arith.constant 8 : i32
    %93 = tpu.dynamic_rotate %92 by %c8_i32 dim 0 : vector<32x32xf32>, i32 -> vector<32x32xf32>
    %c8_i32_33 = arith.constant 8 : i32
    %94 = vector.broadcast %c8_i32_33 : i32 to vector<2x16x32xi32>
    %95 = arith.cmpi sge, %2, %94 : vector<2x16x32xi32>
    %96 = vector.shape_cast %93 : vector<32x32xf32> to vector<2x16x32xf32>
    %cst_34 = arith.constant 0.000000e+00 : f32
    %97 = vector.broadcast %cst_34 : f32 to vector<2x16x32xf32>
    %98 = arith.select %95, %96, %97 : vector<2x16x32xi1>, vector<2x16x32xf32>
    %99 = arith.mulf %91, %98 : vector<2x16x32xf32>
    %100 = arith.addf %99, %83 : vector<2x16x32xf32>
    %101 = vector.shape_cast %91 : vector<2x16x32xf32> to vector<32x32xf32>
    %c8_i32_35 = arith.constant 8 : i32
    %102 = tpu.dynamic_rotate %101 by %c8_i32_35 dim 0 : vector<32x32xf32>, i32 -> vector<32x32xf32>
    %c8_i32_36 = arith.constant 8 : i32
    %103 = vector.broadcast %c8_i32_36 : i32 to vector<2x16x32xi32>
    %104 = arith.cmpi sge, %2, %103 : vector<2x16x32xi32>
    %105 = vector.shape_cast %102 : vector<32x32xf32> to vector<2x16x32xf32>
    %cst_37 = arith.constant 1.000000e+00 : f32
    %106 = vector.broadcast %cst_37 : f32 to vector<2x16x32xf32>
    %107 = arith.select %104, %105, %106 : vector<2x16x32xi1>, vector<2x16x32xf32>
    %108 = arith.mulf %91, %107 : vector<2x16x32xf32>
    %c0_38 = arith.constant 0 : index
    %c0_39 = arith.constant 0 : index
    %c0_40 = arith.constant 0 : index
    %109 = vector.load %arg11[%c0_38, %c0_39, %c0_40] : memref<2x1x32xf32, #tpu.memory_space<vmem>>, vector<2x1x32xf32>
    %110 = vector.broadcast %109 : vector<2x1x32xf32> to vector<2x16x32xf32>
    %111 = arith.mulf %108, %110 : vector<2x16x32xf32>
    %112 = arith.addf %111, %100 : vector<2x16x32xf32>
    %113 = vector.extract_strided_slice %112 {offsets = [0, 15, 0], sizes = [2, 1, 32], strides = [1, 1, 1]} : vector<2x16x32xf32> to vector<2x1x32xf32>
    %c0_41 = arith.constant 0 : index
    %c0_42 = arith.constant 0 : index
    %c0_43 = arith.constant 0 : index
    %114 = vector.load %arg11[%c0_41, %c0_42, %c0_43] : memref<2x1x32xf32, #tpu.memory_space<vmem>>, vector<2x1x32xf32>
    tpu.vector_store %arg11[%c0_41, %c0_42, %c0_43], %113 {strides = array<i32>} : memref<2x1x32xf32, #tpu.memory_space<vmem>>, vector<2x1x32xf32>,
    %115 = arith.mulf %37, %112 : vector<2x16x32xf32>
    %c0_i32_44 = arith.constant 0 : i32
    %116 = arith.cmpi eq, %arg1, %c0_i32_44 : i32
    %117 = arith.extui %116 : i1 to i32
    %c0_i32_45 = arith.constant 0 : i32
    %118 = arith.cmpi ne, %117, %c0_i32_45 : i32
    scf.if %118 {
      %cst_94 = arith.constant 0.000000e+00 : f32
      %232 = vector.broadcast %cst_94 : f32 to vector<2x1x32xf32>
      %c0_95 = arith.constant 0 : index
      %c0_96 = arith.constant 0 : index
      %c0_97 = arith.constant 0 : index
      %233 = vector.load %arg12[%c0_95, %c0_96, %c0_97] : memref<2x1x32xf32, #tpu.memory_space<vmem>>, vector<2x1x32xf32>
      tpu.vector_store %arg12[%c0_95, %c0_96, %c0_97], %232 {strides = array<i32>} : memref<2x1x32xf32, #tpu.memory_space<vmem>>, vector<2x1x32xf32>,
      %cst_98 = arith.constant 0.000000e+00 : f32
      %234 = vector.broadcast %cst_98 : f32 to vector<2x1x32xf32>
      %c0_99 = arith.constant 0 : index
      %c0_100 = arith.constant 0 : index
      %c0_101 = arith.constant 0 : index
      %235 = vector.load %arg13[%c0_99, %c0_100, %c0_101] : memref<2x1x32xf32, #tpu.memory_space<vmem>>, vector<2x1x32xf32>
      tpu.vector_store %arg13[%c0_99, %c0_100, %c0_101], %234 {strides = array<i32>} : memref<2x1x32xf32, #tpu.memory_space<vmem>>, vector<2x1x32xf32>,
    } else {
    }
    %c0_46 = arith.constant 0 : index
    %c0_47 = arith.constant 0 : index
    %c0_48 = arith.constant 0 : index
    %119 = vector.load %arg12[%c0_46, %c0_47, %c0_48] : memref<2x1x32xf32, #tpu.memory_space<vmem>>, vector<2x1x32xf32>
    %120 = tpu.concatenate %119, %115 in 1 : vector<2x1x32xf32>, vector<2x16x32xf32> -> vector<2x17x32xf32>
    %121 = vector.extract_strided_slice %115 {offsets = [0, 15, 0], sizes = [2, 1, 32], strides = [1, 1, 1]} : vector<2x16x32xf32> to vector<2x1x32xf32>
    %c0_49 = arith.constant 0 : index
    %c0_50 = arith.constant 0 : index
    %c0_51 = arith.constant 0 : index
    %122 = vector.load %arg12[%c0_49, %c0_50, %c0_51] : memref<2x1x32xf32, #tpu.memory_space<vmem>>, vector<2x1x32xf32>
    tpu.vector_store %arg12[%c0_49, %c0_50, %c0_51], %121 {strides = array<i32>} : memref<2x1x32xf32, #tpu.memory_space<vmem>>, vector<2x1x32xf32>,
    %123 = arith.truncf %120 : vector<2x17x32xf32> to vector<2x17x32xbf16>
    %124 = vector.extract_strided_slice %123 {offsets = [0, 0, 0], sizes = [2, 16, 32], strides = [1, 1, 1]} : vector<2x17x32xbf16> to vector<2x16x32xbf16>
    %125 = vector.shape_cast %124 : vector<2x16x32xbf16> to vector<32x32xbf16>
    %c0_52 = arith.constant 0 : index
    %c0_53 = arith.constant 0 : index
    %126 = vector.load %arg5[%c0_52, %c0_53] : memref<64x96xbf16, #tpu.memory_space<vmem>>, vector<32x96xbf16>
    %cst_54 = arith.constant dense<0.000000e+00> : vector<32x96xf32>
    %127 = tpu.matmul %125, %126, %cst_54 {dimension_numbers = #tpu.dot_dimension_numbers<[1], [0], [0], [1], [0, 0, 1, 1], [], []>} : vector<32x32xbf16>, vector<32x96xbf16>, vector<32x96xf32> -> vector<32x96xf32>
    %128 = vector.extract_strided_slice %123 {offsets = [0, 1, 0], sizes = [2, 16, 32], strides = [1, 1, 1]} : vector<2x17x32xbf16> to vector<2x16x32xbf16>
    %129 = vector.shape_cast %128 : vector<2x16x32xbf16> to vector<32x32xbf16>
    %c32_55 = arith.constant 32 : index
    %c0_56 = arith.constant 0 : index
    %130 = vector.load %arg5[%c32_55, %c0_56] : memref<64x96xbf16, #tpu.memory_space<vmem>>, vector<32x96xbf16>
    %cst_57 = arith.constant dense<0.000000e+00> : vector<32x96xf32>
    %131 = tpu.matmul %129, %130, %cst_57 {dimension_numbers = #tpu.dot_dimension_numbers<[1], [0], [0], [1], [0, 0, 1, 1], [], []>} : vector<32x32xbf16>, vector<32x96xbf16>, vector<32x96xf32> -> vector<32x96xf32>
    %132 = arith.addf %127, %131 : vector<32x96xf32>
    %c0_58 = arith.constant 0 : index
    %c0_59 = arith.constant 0 : index
    %133 = vector.load %arg6[%c0_58, %c0_59] : memref<1x96xf32, #tpu.memory_space<vmem>>, vector<1x96xf32>
    %134 = vector.broadcast %133 : vector<1x96xf32> to vector<32x96xf32>
    %135 = arith.addf %132, %134 : vector<32x96xf32>
    %136 = vector.shape_cast %135 : vector<32x96xf32> to vector<2x16x96xf32>
    %137 = vector.extract_strided_slice %136 {offsets = [0, 0, 0], sizes = [2, 16, 32], strides = [1, 1, 1]} : vector<2x16x96xf32> to vector<2x16x32xf32>
    %138 = math.tanh %137 : vector<2x16x32xf32>
    %139 = vector.extract_strided_slice %136 {offsets = [0, 0, 32], sizes = [2, 16, 32], strides = [1, 1, 1]} : vector<2x16x96xf32> to vector<2x16x32xf32>
    %140 = arith.negf %139 : vector<2x16x32xf32>
    %141 = math.exp %140 : vector<2x16x32xf32>
    %cst_60 = arith.constant 1.000000e+00 : f32
    %142 = vector.broadcast %cst_60 : f32 to vector<2x16x32xf32>
    %143 = arith.addf %142, %141 : vector<2x16x32xf32>
    %144 = arith.divf %142, %143 : vector<2x16x32xf32>
    %145 = vector.extract_strided_slice %136 {offsets = [0, 0, 64], sizes = [2, 16, 32], strides = [1, 1, 1]} : vector<2x16x96xf32> to vector<2x16x32xf32>
    %146 = arith.negf %145 : vector<2x16x32xf32>
    %147 = math.exp %146 : vector<2x16x32xf32>
    %cst_61 = arith.constant 1.000000e+00 : f32
    %148 = vector.broadcast %cst_61 : f32 to vector<2x16x32xf32>
    %149 = arith.addf %148, %147 : vector<2x16x32xf32>
    %150 = arith.divf %148, %149 : vector<2x16x32xf32>
    %cst_62 = arith.constant 1.000000e+00 : f32
    %151 = vector.broadcast %cst_62 : f32 to vector<2x16x32xf32>
    %152 = arith.subf %151, %144 : vector<2x16x32xf32>
    %153 = arith.mulf %152, %138 : vector<2x16x32xf32>
    %154 = vector.shape_cast %153 : vector<2x16x32xf32> to vector<32x32xf32>
    %c1_i32_63 = arith.constant 1 : i32
    %155 = tpu.dynamic_rotate %154 by %c1_i32_63 dim 0 : vector<32x32xf32>, i32 -> vector<32x32xf32>
    %c1_i32_64 = arith.constant 1 : i32
    %156 = vector.broadcast %c1_i32_64 : i32 to vector<2x16x32xi32>
    %157 = arith.cmpi sge, %2, %156 : vector<2x16x32xi32>
    %158 = vector.shape_cast %155 : vector<32x32xf32> to vector<2x16x32xf32>
    %cst_65 = arith.constant 0.000000e+00 : f32
    %159 = vector.broadcast %cst_65 : f32 to vector<2x16x32xf32>
    %160 = arith.select %157, %158, %159 : vector<2x16x32xi1>, vector<2x16x32xf32>
    %161 = arith.mulf %144, %160 : vector<2x16x32xf32>
    %162 = arith.addf %161, %153 : vector<2x16x32xf32>
    %163 = vector.shape_cast %144 : vector<2x16x32xf32> to vector<32x32xf32>
    %c1_i32_66 = arith.constant 1 : i32
    %164 = tpu.dynamic_rotate %163 by %c1_i32_66 dim 0 : vector<32x32xf32>, i32 -> vector<32x32xf32>
    %c1_i32_67 = arith.constant 1 : i32
    %165 = vector.broadcast %c1_i32_67 : i32 to vector<2x16x32xi32>
    %166 = arith.cmpi sge, %2, %165 : vector<2x16x32xi32>
    %167 = vector.shape_cast %164 : vector<32x32xf32> to vector<2x16x32xf32>
    %cst_68 = arith.constant 1.000000e+00 : f32
    %168 = vector.broadcast %cst_68 : f32 to vector<2x16x32xf32>
    %169 = arith.select %166, %167, %168 : vector<2x16x32xi1>, vector<2x16x32xf32>
    %170 = arith.mulf %144, %169 : vector<2x16x32xf32>
    %171 = vector.shape_cast %162 : vector<2x16x32xf32> to vector<32x32xf32>
    %c2_i32_69 = arith.constant 2 : i32
    %172 = tpu.dynamic_rotate %171 by %c2_i32_69 dim 0 : vector<32x32xf32>, i32 -> vector<32x32xf32>
    %c2_i32_70 = arith.constant 2 : i32
    %173 = vector.broadcast %c2_i32_70 : i32 to vector<2x16x32xi32>
    %174 = arith.cmpi sge, %2, %173 : vector<2x16x32xi32>
    %175 = vector.shape_cast %172 : vector<32x32xf32> to vector<2x16x32xf32>
    %cst_71 = arith.constant 0.000000e+00 : f32
    %176 = vector.broadcast %cst_71 : f32 to vector<2x16x32xf32>
    %177 = arith.select %174, %175, %176 : vector<2x16x32xi1>, vector<2x16x32xf32>
    %178 = arith.mulf %170, %177 : vector<2x16x32xf32>
    %179 = arith.addf %178, %162 : vector<2x16x32xf32>
    %180 = vector.shape_cast %170 : vector<2x16x32xf32> to vector<32x32xf32>
    %c2_i32_72 = arith.constant 2 : i32
    %181 = tpu.dynamic_rotate %180 by %c2_i32_72 dim 0 : vector<32x32xf32>, i32 -> vector<32x32xf32>
    %c2_i32_73 = arith.constant 2 : i32
    %182 = vector.broadcast %c2_i32_73 : i32 to vector<2x16x32xi32>
    %183 = arith.cmpi sge, %2, %182 : vector<2x16x32xi32>
    %184 = vector.shape_cast %181 : vector<32x32xf32> to vector<2x16x32xf32>
    %cst_74 = arith.constant 1.000000e+00 : f32
    %185 = vector.broadcast %cst_74 : f32 to vector<2x16x32xf32>
    %186 = arith.select %183, %184, %185 : vector<2x16x32xi1>, vector<2x16x32xf32>
    %187 = arith.mulf %170, %186 : vector<2x16x32xf32>
    %188 = vector.shape_cast %179 : vector<2x16x32xf32> to vector<32x32xf32>
    %c4_i32_75 = arith.constant 4 : i32
    %189 = tpu.dynamic_rotate %188 by %c4_i32_75 dim 0 : vector<32x32xf32>, i32 -> vector<32x32xf32>
    %c4_i32_76 = arith.constant 4 : i32
    %190 = vector.broadcast %c4_i32_76 : i32 to vector<2x16x32xi32>
    %191 = arith.cmpi sge, %2, %190 : vector<2x16x32xi32>
    %192 = vector.shape_cast %189 : vector<32x32xf32> to vector<2x16x32xf32>
    %cst_77 = arith.constant 0.000000e+00 : f32
    %193 = vector.broadcast %cst_77 : f32 to vector<2x16x32xf32>
    %194 = arith.select %191, %192, %193 : vector<2x16x32xi1>, vector<2x16x32xf32>
    %195 = arith.mulf %187, %194 : vector<2x16x32xf32>
    %196 = arith.addf %195, %179 : vector<2x16x32xf32>
    %197 = vector.shape_cast %187 : vector<2x16x32xf32> to vector<32x32xf32>
    %c4_i32_78 = arith.constant 4 : i32
    %198 = tpu.dynamic_rotate %197 by %c4_i32_78 dim 0 : vector<32x32xf32>, i32 -> vector<32x32xf32>
    %c4_i32_79 = arith.constant 4 : i32
    %199 = vector.broadcast %c4_i32_79 : i32 to vector<2x16x32xi32>
    %200 = arith.cmpi sge, %2, %199 : vector<2x16x32xi32>
    %201 = vector.shape_cast %198 : vector<32x32xf32> to vector<2x16x32xf32>
    %cst_80 = arith.constant 1.000000e+00 : f32
    %202 = vector.broadcast %cst_80 : f32 to vector<2x16x32xf32>
    %203 = arith.select %200, %201, %202 : vector<2x16x32xi1>, vector<2x16x32xf32>
    %204 = arith.mulf %187, %203 : vector<2x16x32xf32>
    %205 = vector.shape_cast %196 : vector<2x16x32xf32> to vector<32x32xf32>
    %c8_i32_81 = arith.constant 8 : i32
    %206 = tpu.dynamic_rotate %205 by %c8_i32_81 dim 0 : vector<32x32xf32>, i32 -> vector<32x32xf32>
    %c8_i32_82 = arith.constant 8 : i32
    %207 = vector.broadcast %c8_i32_82 : i32 to vector<2x16x32xi32>
    %208 = arith.cmpi sge, %2, %207 : vector<2x16x32xi32>
    %209 = vector.shape_cast %206 : vector<32x32xf32> to vector<2x16x32xf32>
    %cst_83 = arith.constant 0.000000e+00 : f32
    %210 = vector.broadcast %cst_83 : f32 to vector<2x16x32xf32>
    %211 = arith.select %208, %209, %210 : vector<2x16x32xi1>, vector<2x16x32xf32>
    %212 = arith.mulf %204, %211 : vector<2x16x32xf32>
    %213 = arith.addf %212, %196 : vector<2x16x32xf32>
    %214 = vector.shape_cast %204 : vector<2x16x32xf32> to vector<32x32xf32>
    %c8_i32_84 = arith.constant 8 : i32
    %215 = tpu.dynamic_rotate %214 by %c8_i32_84 dim 0 : vector<32x32xf32>, i32 -> vector<32x32xf32>
    %c8_i32_85 = arith.constant 8 : i32
    %216 = vector.broadcast %c8_i32_85 : i32 to vector<2x16x32xi32>
    %217 = arith.cmpi sge, %2, %216 : vector<2x16x32xi32>
    %218 = vector.shape_cast %215 : vector<32x32xf32> to vector<2x16x32xf32>
    %cst_86 = arith.constant 1.000000e+00 : f32
    %219 = vector.broadcast %cst_86 : f32 to vector<2x16x32xf32>
    %220 = arith.select %217, %218, %219 : vector<2x16x32xi1>, vector<2x16x32xf32>
    %221 = arith.mulf %204, %220 : vector<2x16x32xf32>
    %c0_87 = arith.constant 0 : index
    %c0_88 = arith.constant 0 : index
    %c0_89 = arith.constant 0 : index
    %222 = vector.load %arg13[%c0_87, %c0_88, %c0_89] : memref<2x1x32xf32, #tpu.memory_space<vmem>>, vector<2x1x32xf32>
    %223 = vector.broadcast %222 : vector<2x1x32xf32> to vector<2x16x32xf32>
    %224 = arith.mulf %221, %223 : vector<2x16x32xf32>
    %225 = arith.addf %224, %213 : vector<2x16x32xf32>
    %226 = vector.extract_strided_slice %225 {offsets = [0, 15, 0], sizes = [2, 1, 32], strides = [1, 1, 1]} : vector<2x16x32xf32> to vector<2x1x32xf32>
    %c0_90 = arith.constant 0 : index
    %c0_91 = arith.constant 0 : index
    %c0_92 = arith.constant 0 : index
    %227 = vector.load %arg13[%c0_90, %c0_91, %c0_92] : memref<2x1x32xf32, #tpu.memory_space<vmem>>, vector<2x1x32xf32>
    tpu.vector_store %arg13[%c0_90, %c0_91, %c0_92], %226 {strides = array<i32>} : memref<2x1x32xf32, #tpu.memory_space<vmem>>, vector<2x1x32xf32>,
    %228 = arith.mulf %150, %225 : vector<2x16x32xf32>
    %c3_i32 = arith.constant 3 : i32
    %229 = arith.cmpi eq, %arg1, %c3_i32 : i32
    %230 = arith.extui %229 : i1 to i32
    %c0_i32_93 = arith.constant 0 : i32
    %231 = arith.cmpi ne, %230, %c0_i32_93 : i32
    scf.if %231 {
      %232 = vector.extract_strided_slice %228 {offsets = [0, 15, 0], sizes = [2, 1, 32], strides = [1, 1, 1]} : vector<2x16x32xf32> to vector<2x1x32xf32>
      %233 = vector.shape_cast %232 : vector<2x1x32xf32> to vector<2x32xf32>
      %234 = arith.truncf %233 : vector<2x32xf32> to vector<2x32xbf16>
      %c0_94 = arith.constant 0 : index
      %c0_95 = arith.constant 0 : index
      %235 = vector.load %arg7[%c0_94, %c0_95] : memref<32x5xbf16, #tpu.memory_space<vmem>>, vector<32x5xbf16>
      %cst_96 = arith.constant dense<0.000000e+00> : vector<2x5xf32>
      %236 = tpu.matmul %234, %235, %cst_96 {dimension_numbers = #tpu.dot_dimension_numbers<[1], [0], [0], [1], [0, 0, 1, 1], [], []>} : vector<2x32xbf16>, vector<32x5xbf16>, vector<2x5xf32> -> vector<2x5xf32>
      %c0_97 = arith.constant 0 : index
      %c0_98 = arith.constant 0 : index
      %237 = vector.load %arg8[%c0_97, %c0_98] : memref<1x5xf32, #tpu.memory_space<vmem>>, vector<1x5xf32>
      %238 = vector.broadcast %237 : vector<1x5xf32> to vector<2x5xf32>
      %239 = arith.addf %236, %238 : vector<2x5xf32>
      %240 = vector.shape_cast %239 : vector<2x5xf32> to vector<2x1x5xf32>
      %c0_99 = arith.constant 0 : index
      %c0_100 = arith.constant 0 : index
      %c0_101 = arith.constant 0 : index
      %241 = vector.load %arg9[%c0_99, %c0_100, %c0_101] : memref<2x1x5xf32, #tpu.memory_space<vmem>>, vector<2x1x5xf32>
      tpu.vector_store %arg9[%c0_99, %c0_100, %c0_101], %240 {strides = array<i32>} : memref<2x1x5xf32, #tpu.memory_space<vmem>>, vector<2x1x5xf32>,
    } else {
    }
    return
  }
  func.func @transform_0(%arg0: i32, %arg1: i32) -> (i32, i32, i32) {
    %c0_i32 = arith.constant 0 : i32
    %c0_i32_0 = arith.constant 0 : i32
    return %arg0, %arg1, %c0_i32 : i32, i32, i32
  }
  func.func @transform_1(%arg0: i32, %arg1: i32) -> (i32, i32) {
    %c0_i32 = arith.constant 0 : i32
    %c0_i32_0 = arith.constant 0 : i32
    %c0_i32_1 = arith.constant 0 : i32
    return %c0_i32, %c0_i32_0 : i32, i32
  }
  func.func @transform_2(%arg0: i32, %arg1: i32) -> (i32, i32) {
    %c0_i32 = arith.constant 0 : i32
    %c0_i32_0 = arith.constant 0 : i32
    %c0_i32_1 = arith.constant 0 : i32
    return %c0_i32, %c0_i32_0 : i32, i32
  }
  func.func @transform_3(%arg0: i32, %arg1: i32) -> (i32, i32) {
    %c0_i32 = arith.constant 0 : i32
    %c0_i32_0 = arith.constant 0 : i32
    %c0_i32_1 = arith.constant 0 : i32
    return %c0_i32, %c0_i32_0 : i32, i32
  }
  func.func @transform_4(%arg0: i32, %arg1: i32) -> (i32, i32) {
    %c0_i32 = arith.constant 0 : i32
    %c0_i32_0 = arith.constant 0 : i32
    %c0_i32_1 = arith.constant 0 : i32
    return %c0_i32, %c0_i32_0 : i32, i32
  }
  func.func @transform_5(%arg0: i32, %arg1: i32) -> (i32, i32) {
    %c0_i32 = arith.constant 0 : i32
    %c0_i32_0 = arith.constant 0 : i32
    %c0_i32_1 = arith.constant 0 : i32
    return %c0_i32, %c0_i32_0 : i32, i32
  }
  func.func @transform_6(%arg0: i32, %arg1: i32) -> (i32, i32) {
    %c0_i32 = arith.constant 0 : i32
    %c0_i32_0 = arith.constant 0 : i32
    %c0_i32_1 = arith.constant 0 : i32
    return %c0_i32, %c0_i32_0 : i32, i32
  }
  func.func @transform_7(%arg0: i32, %arg1: i32) -> (i32, i32, i32) {
    %c0_i32 = arith.constant 0 : i32
    %c0_i32_0 = arith.constant 0 : i32
    %c0_i32_1 = arith.constant 0 : i32
    return %arg0, %c0_i32, %c0_i32_0 : i32, i32, i32
  }
}

</mosaic_0001>

<llo_original>
// kernel: tpu_custom_call.1
$region0: #{tpu_custom_call.1}
  #allocation0 [shape = 'u32[]', space=smem, size = 0x4, offset = 0x4, fixed_abs, tag = 'smem constant byte address 0x4 - core index']
  #allocation1 [shape = 'u32[144,128]{1,0:T(1,128)}', space=vmem, size = 0x12000, scoped, tag = 'internal scratch']
  #allocation2 [shape = 'f32[2,1,32]{2,1,0:T(1,128)}', space=vmem, size = 0x400, scoped, tag = 'scratch operand']
  #allocation3 [shape = 'f32[2,1,32]{2,1,0:T(1,128)}', space=vmem, size = 0x400, scoped, tag = 'scratch operand']
  #allocation4 [shape = 'f32[2,1,32]{2,1,0:T(1,128)}', space=vmem, size = 0x400, scoped, tag = 'scratch operand']
  #allocation5 [shape = 'f32[2,1,32]{2,1,0:T(1,128)}', space=vmem, size = 0x400, scoped, tag = 'scratch operand']
  %s0 = inlined_call_operand.vmem [shape: bf16[4,64,32], index: 0, kind: input, shape index: {}]
  %s1 = inlined_call_operand.vmem [shape: bf16[64,96], index: 1, kind: input, shape index: {}]
  %s2 = inlined_call_operand.vmem [shape: f32[1,96], index: 2, kind: input, shape index: {}]
  %s3 = inlined_call_operand.vmem [shape: bf16[64,96], index: 3, kind: input, shape index: {}]
  %s4 = inlined_call_operand.vmem [shape: f32[1,96], index: 4, kind: input, shape index: {}]
  %s5 = inlined_call_operand.vmem [shape: bf16[32,5], index: 5, kind: input, shape index: {}]
  %s6 = inlined_call_operand.vmem [shape: f32[1,5], index: 6, kind: input, shape index: {}]
  %s7 = inlined_call_operand.hbm [shape: f32[4,1,5], index: 7, kind: output, shape index: {}]
  %s8 = sld [smem:[#allocation0]]
  $region114: #{tpu_custom_call.1} parent=0
    _
  %s10 = ssub.s32 1, %s8
  %s11 = scalar_select 0, %s10, %s8
  $region1: #{tpu_custom_call.1} parent=0
    #allocation6 [shape = 'u8[16384]{0}', space=vmem, size = 0x4000, scoped, tag = 'input window, operand 0']
    #allocation7 [shape = 'u8[2048]{0}', space=vmem, size = 0x800, scoped, tag = 'output window, operand 0']
    #allocation8 [shape = 's32[2]{0}', space=sflag, size = 0x8, scoped, tag = 'scoped memory for tpu_custom_call.1']
    %12 = vsyncpa [#allocation8], 0
    %s13 = scalar_lea.sflag [#allocation8], 1
    %14 = vsyncpa %s13, 0
    loop: start=0, step=1, limit=10
    $region2: #{tpu_custom_call.1} parent=1 // loop_pre_header
      _
    $region3: #{tpu_custom_call.1} parent=1 // loop_header
      %s16 = sphi 0, %s20
      %p17 = scmp.ge.s32.totalorder %s16, 10
      %s23 = sphi 0, %s35
      %s24 = sphi 0, %s31
      %s25 = sphi 0, %s23
      %s26 = sphi 0, %s24
      %s27 = sphi 0, %s25
      %s28 = sphi 0, %s26
      %s40 = sphi 0, %s42
      %s43 = sphi 0, %s40
      %s44 = sphi 0, %s43
      %s60 = sphi 0, %s44
      %s64 = sphi 0, %s64
      %s66 = sphi 0, %s64
      %s67 = sphi 0, %s66
      %s81 = sphi 0, %s67
      %s85 = sphi 0, %s85
      %s87 = sphi 0, %s85
      %s88 = sphi 0, %s87
      %s102 = sphi 0, %s88
      %s106 = sphi 0, %s106
      %s108 = sphi 0, %s106
      %s109 = sphi 0, %s108
      %s123 = sphi 0, %s109
      %s127 = sphi 0, %s127
      %s129 = sphi 0, %s127
      %s130 = sphi 0, %s129
      %s144 = sphi 0, %s130
      %s148 = sphi 0, %s148
      %s150 = sphi 0, %s148
      %s151 = sphi 0, %s150
      %s165 = sphi 0, %s151
      %s169 = sphi 0, %s169
      %s171 = sphi 0, %s169
      %s172 = sphi 0, %s171
      %s186 = sphi 0, %s172
      %s192 = sphi 0, %s194
      %s195 = sphi 0, %s192
      %s196 = sphi 0, %s195
      %s212 = sphi 0, %s196
    $region4: #{tpu_custom_call.1} parent=1 // loop_header_branch
      %19 = sbr.rel (%p17) target = $region8
    $region5: #{tpu_custom_call.1} parent=1 // loop_body
      %s21 = ssub.s32 %s16, 1
      %s22 = ssub.s32 %s16, 2
      %s29 = sadd.s32 1, %s24
      %p30 = scmp.ge.s32.totalorder %s29, 4
      %s31 = scalar_select %p30, 0, %s29
      %s32 = sadd.s32 1, %s23
      %s33 = scalar_select %p30, %s32, %s23
      %p34 = scmp.ge.s32.totalorder %s33, 2
      %s35 = scalar_select %p34, 0, %s33
      %s36 = ssub.s32 %s23, %s35
      %s37 = ssub.s32 %s24, %s31
      %s38 = sor.u32 %s36, %s37
      %p39 = scmp.eq.s32.totalorder %s38, 0
      %s41 = sadd.s32 %s40, 1
      %s42 = scalar_select %p39, %s40, %s41
      %p45 = pneg %p39
      %p46 = scmp.eq.s32.totalorder %s16, 7
      %p47 = por %p45, %p46
      %p48 = scmp.ne.s32.totalorder %s40, %s43
      %p49 = scmp.eq.s32.totalorder %s16, 0
      %p50 = por %p48, %p49
      %p51 = scmp.ne.s32.totalorder %s40, %s43
      %p52 = scmp.eq.s32.totalorder %s21, 7
      %p53 = por %p51, %p52
      %p54 = scmp.ne.s32.totalorder %s43, %s44
      %p55 = scmp.eq.s32.totalorder %s21, 0
      %p56 = por %p54, %p55
      %p57 = scmp.ne.s32.totalorder %s43, %s44
      %p58 = scmp.eq.s32.totalorder %s22, 7
      %p59 = por %p57, %p58
      %p61 = scmp.ne.s32.totalorder %s44, %s60
      %p62 = scmp.eq.s32.totalorder %s22, 0
      %p63 = por %p61, %p62
      %s65 = sadd.s32 %s64, 1
      %p68 = scmp.eq.s32.totalorder %s16, 7
      %p69 = scmp.ne.s32.totalorder %s64, %s66
      %p70 = scmp.eq.s32.totalorder %s16, 0
      %p71 = por %p69, %p70
      %p72 = scmp.ne.s32.totalorder %s64, %s66
      %p73 = scmp.eq.s32.totalorder %s21, 7
      %p74 = por %p72, %p73
      %p75 = scmp.ne.s32.totalorder %s66, %s67
      %p76 = scmp.eq.s32.totalorder %s21, 0
      %p77 = por %p75, %p76
      %p78 = scmp.ne.s32.totalorder %s66, %s67
      %p79 = scmp.eq.s32.totalorder %s22, 7
      %p80 = por %p78, %p79
      %p82 = scmp.ne.s32.totalorder %s67, %s81
      %p83 = scmp.eq.s32.totalorder %s22, 0
      %p84 = por %p82, %p83
      %s86 = sadd.s32 %s85, 1
      %p89 = scmp.eq.s32.totalorder %s16, 7
      %p90 = scmp.ne.s32.totalorder %s85, %s87
      %p91 = scmp.eq.s32.totalorder %s16, 0
      %p92 = por %p90, %p91
      %p93 = scmp.ne.s32.totalorder %s85, %s87
      %p94 = scmp.eq.s32.totalorder %s21, 7
      %p95 = por %p93, %p94
      %p96 = scmp.ne.s32.totalorder %s87, %s88
      %p97 = scmp.eq.s32.totalorder %s21, 0
      %p98 = por %p96, %p97
      %p99 = scmp.ne.s32.totalorder %s87, %s88
      %p100 = scmp.eq.s32.totalorder %s22, 7
      %p101 = por %p99, %p100
      %p103 = scmp.ne.s32.totalorder %s88, %s102
      %p104 = scmp.eq.s32.totalorder %s22, 0
      %p105 = por %p103, %p104
      %s107 = sadd.s32 %s106, 1
      %p110 = scmp.eq.s32.totalorder %s16, 7
      %p111 = scmp.ne.s32.totalorder %s106, %s108
      %p112 = scmp.eq.s32.totalorder %s16, 0
      %p113 = por %p111, %p112
      %p114 = scmp.ne.s32.totalorder %s106, %s108
      %p115 = scmp.eq.s32.totalorder %s21, 7
      %p116 = por %p114, %p115
      %p117 = scmp.ne.s32.totalorder %s108, %s109
      %p118 = scmp.eq.s32.totalorder %s21, 0
      %p119 = por %p117, %p118
      %p120 = scmp.ne.s32.totalorder %s108, %s109
      %p121 = scmp.eq.s32.totalorder %s22, 7
      %p122 = por %p120, %p121
      %p124 = scmp.ne.s32.totalorder %s109, %s123
      %p125 = scmp.eq.s32.totalorder %s22, 0
      %p126 = por %p124, %p125
      %s128 = sadd.s32 %s127, 1
      %p131 = scmp.eq.s32.totalorder %s16, 7
      %p132 = scmp.ne.s32.totalorder %s127, %s129
      %p133 = scmp.eq.s32.totalorder %s16, 0
      %p134 = por %p132, %p133
      %p135 = scmp.ne.s32.totalorder %s127, %s129
      %p136 = scmp.eq.s32.totalorder %s21, 7
      %p137 = por %p135, %p136
      %p138 = scmp.ne.s32.totalorder %s129, %s130
      %p139 = scmp.eq.s32.totalorder %s21, 0
      %p140 = por %p138, %p139
      %p141 = scmp.ne.s32.totalorder %s129, %s130
      %p142 = scmp.eq.s32.totalorder %s22, 7
      %p143 = por %p141, %p142
      %p145 = scmp.ne.s32.totalorder %s130, %s144
      %p146 = scmp.eq.s32.totalorder %s22, 0
      %p147 = por %p145, %p146
      %s149 = sadd.s32 %s148, 1
      %p152 = scmp.eq.s32.totalorder %s16, 7
      %p153 = scmp.ne.s32.totalorder %s148, %s150
      %p154 = scmp.eq.s32.totalorder %s16, 0
      %p155 = por %p153, %p154
      %p156 = scmp.ne.s32.totalorder %s148, %s150
      %p157 = scmp.eq.s32.totalorder %s21, 7
      %p158 = por %p156, %p157
      %p159 = scmp.ne.s32.totalorder %s150, %s151
      %p160 = scmp.eq.s32.totalorder %s21, 0
      %p161 = por %p159, %p160
      %p162 = scmp.ne.s32.totalorder %s150, %s151
      %p163 = scmp.eq.s32.totalorder %s22, 7
      %p164 = por %p162, %p163
      %p166 = scmp.ne.s32.totalorder %s151, %s165
      %p167 = scmp.eq.s32.totalorder %s22, 0
      %p168 = por %p166, %p167
      %s170 = sadd.s32 %s169, 1
      %p173 = scmp.eq.s32.totalorder %s16, 7
      %p174 = scmp.ne.s32.totalorder %s169, %s171
      %p175 = scmp.eq.s32.totalorder %s16, 0
      %p176 = por %p174, %p175
      %p177 = scmp.ne.s32.totalorder %s169, %s171
      %p178 = scmp.eq.s32.totalorder %s21, 7
      %p179 = por %p177, %p178
      %p180 = scmp.ne.s32.totalorder %s171, %s172
      %p181 = scmp.eq.s32.totalorder %s21, 0
      %p182 = por %p180, %p181
      %p183 = scmp.ne.s32.totalorder %s171, %s172
      %p184 = scmp.eq.s32.totalorder %s22, 7
      %p185 = por %p183, %p184
      %p187 = scmp.ne.s32.totalorder %s172, %s186
      %p188 = scmp.eq.s32.totalorder %s22, 0
      %p189 = por %p187, %p188
      %s190 = ssub.s32 %s23, %s35
      %p191 = scmp.eq.s32.totalorder %s190, 0
      %s193 = sadd.s32 %s192, 1
      %s194 = scalar_select %p191, %s192, %s193
      %p197 = pneg %p191
      %p198 = scmp.eq.s32.totalorder %s16, 7
      %p199 = por %p197, %p198
      %p200 = scmp.ne.s32.totalorder %s192, %s195
      %p201 = scmp.eq.s32.totalorder %s16, 0
      %p202 = por %p200, %p201
      %p203 = scmp.ne.s32.totalorder %s192, %s195
      %p204 = scmp.eq.s32.totalorder %s21, 7
      %p205 = por %p203, %p204
      %p206 = scmp.ne.s32.totalorder %s195, %s196
      %p207 = scmp.eq.s32.totalorder %s21, 0
      %p208 = por %p206, %p207
      %p209 = scmp.ne.s32.totalorder %s195, %s196
      %p210 = scmp.eq.s32.totalorder %s22, 7
      %p211 = por %p209, %p210
      %p213 = scmp.ne.s32.totalorder %s196, %s212
      %p214 = scmp.eq.s32.totalorder %s22, 0
      %p215 = por %p213, %p214
      %p216 = scmp.le.s32.totalorder 1, %s16
      %p217 = scmp.lt.s32.totalorder %s16, 9
      %p218 = pnand %p216, %p217
      %p219 = pneg %p218
      // Predicated region
      $region9: #{tpu_custom_call.1} parent=5 // pred_check
        _
      $region10: #{tpu_custom_call.1} parent=5 // pred_check_branch
        %221 = sbr.rel (%p218) target = $region12
      $region11: #{tpu_custom_call.1} parent=5 // pred_region
        %s222 = ssub.s32 %s16, 1
        // Predicated region
        $region13: #{tpu_custom_call.1} parent=11 // pred_check
          %p223 = pneg %p77
        $region14: #{tpu_custom_call.1} parent=11 // pred_check_branch
          %225 = sbr.rel (%p223) target = $region16
        $region15: #{tpu_custom_call.1} parent=11 // pred_region
          _
        $region16: #{tpu_custom_call.1} parent=11 // pred_fallthru
          _
        // Predicated region
        $region17: #{tpu_custom_call.1} parent=11 // pred_check
          %p226 = pneg %p98
        $region18: #{tpu_custom_call.1} parent=11 // pred_check_branch
          %228 = sbr.rel (%p226) target = $region20
        $region19: #{tpu_custom_call.1} parent=11 // pred_region
          _
        $region20: #{tpu_custom_call.1} parent=11 // pred_fallthru
          _
        // Predicated region
        $region21: #{tpu_custom_call.1} parent=11 // pred_check
          %p229 = pneg %p119
        $region22: #{tpu_custom_call.1} parent=11 // pred_check_branch
          %231 = sbr.rel (%p229) target = $region24
        $region23: #{tpu_custom_call.1} parent=11 // pred_region
          _
        $region24: #{tpu_custom_call.1} parent=11 // pred_fallthru
          _
        // Predicated region
        $region25: #{tpu_custom_call.1} parent=11 // pred_check
          %p232 = pneg %p140
        $region26: #{tpu_custom_call.1} parent=11 // pred_check_branch
          %234 = sbr.rel (%p232) target = $region28
        $region27: #{tpu_custom_call.1} parent=11 // pred_region
          _
        $region28: #{tpu_custom_call.1} parent=11 // pred_fallthru
          _
        // Predicated region
        $region29: #{tpu_custom_call.1} parent=11 // pred_check
          %p235 = pneg %p161
        $region30: #{tpu_custom_call.1} parent=11 // pred_check_branch
          %237 = sbr.rel (%p235) target = $region32
        $region31: #{tpu_custom_call.1} parent=11 // pred_region
          _
        $region32: #{tpu_custom_call.1} parent=11 // pred_fallthru
          _
        // Predicated region
        $region33: #{tpu_custom_call.1} parent=11 // pred_check
          %p238 = pneg %p182
        $region34: #{tpu_custom_call.1} parent=11 // pred_check_branch
          %240 = sbr.rel (%p238) target = $region36
        $region35: #{tpu_custom_call.1} parent=11 // pred_region
          _
        $region36: #{tpu_custom_call.1} parent=11 // pred_fallthru
          _
      $region12: #{tpu_custom_call.1} parent=5 // pred_fallthru
        _
      %p241 = scmp.lt.s32.totalorder %s16, 8
      // Predicated region
      $region37: #{tpu_custom_call.1} parent=5 // pred_check
        %p242 = pneg %p241
      $region38: #{tpu_custom_call.1} parent=5 // pred_check_branch
        %244 = sbr.rel (%p242) target = $region40
      $region39: #{tpu_custom_call.1} parent=5 // pred_region
        // Predicated region
        $region41: #{tpu_custom_call.1} parent=39 // pred_check
          %p245 = pneg %p50
        $region42: #{tpu_custom_call.1} parent=39 // pred_check_branch
          %247 = sbr.rel (%p245) target = $region44
        $region43: #{tpu_custom_call.1} parent=39 // pred_region
          %s248 = sand.u32 %s40, 1
          %s249 = sand.u32 %s40, 1
          %s250 = smul.addr %s249, 16
          %s251 = scalar_lea.vmem [#allocation6], %s250
          %s252 = smul.u32 2, %s23
          %s253 = smul.u32 2, %s24
          %s254 = smul.addr %s252, 8
          %s255 = sadd.s32 %s253, %s254
          %s256 = smul.addr %s255, 4
          %s257 = scalar_lea.vmem %s0, %s256
          // Predicated region
          $region45: #{tpu_custom_call.1} parent=43 // pred_check
            _
          $region46: #{tpu_custom_call.1} parent=43 // pred_check_branch
            %259 = sbr.rel (0) target = $region48
          $region47: #{tpu_custom_call.1} parent=43 // pred_region
            // Predicated region
            $region49: #{tpu_custom_call.1} parent=47 // pred_check
              _
            $region50: #{tpu_custom_call.1} parent=47 // pred_check_branch
              %261 = sbr.rel target = $region52
            $region51: #{tpu_custom_call.1} parent=47 // pred_region
              // Predicated region
              $region64: #{tpu_custom_call.1} parent=51 // pred_check
                _
              $region65: #{tpu_custom_call.1} parent=51 // pred_check_branch
                %283 = sbr.rel (0) target = $region67
              $region66: #{tpu_custom_call.1} parent=51 // pred_region
                loop: start=0, step=1, limit=1
                $region68: #{tpu_custom_call.1} parent=66 // loop_pre_header
                  _
                $region69: #{tpu_custom_call.1} parent=66 // loop_header
                  %s285 = sphi 0, %s289
                  %p286 = scmp.ge.s32.totalorder %s285, 1
                  %s290 = sphi %s257, %s257
                  %s291 = sphi %s251, %s251
                $region70: #{tpu_custom_call.1} parent=66 // loop_header_branch
                  %288 = sbr.rel (%p286) target = $region74
                $region71: #{tpu_custom_call.1} parent=66 // loop_body
                  _
                $region72: #{tpu_custom_call.1} parent=66 // loop_footer
                  %s289 = sadd.s32 1, %s285
                $region73: #{tpu_custom_call.1} parent=66 // loop_footer_branch
                  %284 = sbr.rel target = $region69
                $region74: #{tpu_custom_call.1} parent=66 // loop_exit
                  _
                %s293 = ssub.s32 16, 1
                loop: start=0, step=1, limit=1
                $region75: #{tpu_custom_call.1} parent=66 // loop_pre_header
                  _
                $region76: #{tpu_custom_call.1} parent=66 // loop_header
                  %s295 = sphi 0, %s299
                  %p296 = scmp.ge.s32.totalorder %s295, 1
                  %s300 = sphi %s257, %s257
                  %s301 = sphi %s251, %s251
                $region77: #{tpu_custom_call.1} parent=66 // loop_header_branch
                  %298 = sbr.rel (%p296) target = $region81
                $region78: #{tpu_custom_call.1} parent=66 // loop_body
                  %v302 = vld [vmem:[%s300] sm:%s293]
                  %303 = vst [vmem:[%s301] sm:%s293] %v302
                  %v304 = vld [vmem:[%s300 + $0x4] sm:%s293]
                  %305 = vst [vmem:[%s301 + $0x4] sm:%s293] %v304
                  %v306 = vld [vmem:[%s300 + $0x20] sm:%s293]
                  %307 = vst [vmem:[%s301 + $0x8] sm:%s293] %v306
                  %v308 = vld [vmem:[%s300 + $0x24] sm:%s293]
                  %309 = vst [vmem:[%s301 + $0xc] sm:%s293] %v308
                $region79: #{tpu_custom_call.1} parent=66 // loop_footer
                  %s299 = sadd.s32 1, %s295
                $region80: #{tpu_custom_call.1} parent=66 // loop_footer_branch
                  %294 = sbr.rel target = $region76
                $region81: #{tpu_custom_call.1} parent=66 // loop_exit
                  _
              $region67: #{tpu_custom_call.1} parent=51 // pred_fallthru
                _
            $region52: #{tpu_custom_call.1} parent=47 // pred_fallthru
              _
            // Predicated region
            $region53: #{tpu_custom_call.1} parent=47 // pred_check
              _
            $region54: #{tpu_custom_call.1} parent=47 // pred_check_branch
              %263 = sbr.rel (0) target = $region56
            $region55: #{tpu_custom_call.1} parent=47 // pred_region
              %s265 = ssub.s32 16, 1
              loop: start=0, step=1, limit=1
              $region57: #{tpu_custom_call.1} parent=55 // loop_pre_header
                _
              $region58: #{tpu_custom_call.1} parent=55 // loop_header
                %s267 = sphi 0, %s271
                %p268 = scmp.ge.s32.totalorder %s267, 1
                %s272 = sphi %s257, %s257
                %s273 = sphi %s251, %s251
              $region59: #{tpu_custom_call.1} parent=55 // loop_header_branch
                %270 = sbr.rel (%p268) target = $region63
              $region60: #{tpu_custom_call.1} parent=55 // loop_body
                %v274 = vld [vmem:[%s272] sm:%s265]
                %275 = vst [vmem:[%s273] sm:%s265] %v274
                %v276 = vld [vmem:[%s272 + $0x4] sm:%s265]
                %277 = vst [vmem:[%s273 + $0x4] sm:%s265] %v276
                %v278 = vld [vmem:[%s272 + $0x20] sm:%s265]
                %279 = vst [vmem:[%s273 + $0x8] sm:%s265] %v278
                %v280 = vld [vmem:[%s272 + $0x24] sm:%s265]
                %281 = vst [vmem:[%s273 + $0xc] sm:%s265] %v280
              $region61: #{tpu_custom_call.1} parent=55 // loop_footer
                %s271 = sadd.s32 1, %s267
              $region62: #{tpu_custom_call.1} parent=55 // loop_footer_branch
                %266 = sbr.rel target = $region58
              $region63: #{tpu_custom_call.1} parent=55 // loop_exit
                _
            $region56: #{tpu_custom_call.1} parent=47 // pred_fallthru
              _
          $region48: #{tpu_custom_call.1} parent=43 // pred_fallthru
            _
          %310 = vnop
        $region44: #{tpu_custom_call.1} parent=39 // pred_fallthru
          _
      $region40: #{tpu_custom_call.1} parent=5 // pred_fallthru
        _
      %p311 = scmp.le.s32.totalorder 1, %s16
      %p312 = scmp.lt.s32.totalorder %s16, 9
      %p313 = pnand %p311, %p312
      %p314 = pneg %p313
      // Predicated region
      $region82: #{tpu_custom_call.1} parent=5 // pred_check
        _
      $region83: #{tpu_custom_call.1} parent=5 // pred_check_branch
        %316 = sbr.rel (%p313) target = $region85
      $region84: #{tpu_custom_call.1} parent=5 // pred_region
        %s317 = ssub.s32 %s16, 1
        %s318 = sand.u32 %s43, 1
        %s319 = sand.u32 %s43, 1
        %s320 = smul.addr %s319, 16
        %s321 = scalar_lea.vmem [#allocation6], %s320
        // Predicated region
        $region86: #{tpu_custom_call.1} parent=84 // pred_check
          %p322 = pneg %p56
        $region87: #{tpu_custom_call.1} parent=84 // pred_check_branch
          %324 = sbr.rel (%p322) target = $region89
        $region88: #{tpu_custom_call.1} parent=84 // pred_region
          _
        $region89: #{tpu_custom_call.1} parent=84 // pred_fallthru
          _
        %s325 = sand.u32 %s43, 1
        %s326 = sand.u32 %s43, 1
        %s327 = smul.addr %s326, 16
        %s328 = scalar_lea.vmem [#allocation6], %s327
        %p329 = pneg %p56
        %p330 = pneg %p53
        %p331 = pneg %p77
        %p332 = pneg %p74
        %p333 = pneg %p98
        %p334 = pneg %p95
        %p335 = pneg %p119
        %p336 = pneg %p116
        %p337 = pneg %p140
        %p338 = pneg %p137
        %p339 = pneg %p161
        %p340 = pneg %p158
        %p341 = pneg %p182
        %p342 = pneg %p179
        %p343 = pneg %p208
        %p344 = pneg %p205
        %s345 = sand.u32 %s195, 1
        %s346 = scalar_lea.sflag [#allocation8], %s345
        %s347 = sand.u32 %s195, 1
        %s348 = smul.addr %s347, 2
        %s349 = scalar_lea.vmem [#allocation7], %s348
        %s350 = smul.u32 2, %s25
        %s351 = smul.u32 2, %s26
        %s352 = smul.u32 2, %s25
        %v354 = vld [vmem:[%s321] sm:$0xf]
        %v355 = vld [vmem:[%s321 + $0x4] sm:$0xf]
        %v356 = vld [vmem:[%s321 + $0x8] sm:$0xf]
        %v357 = vld [vmem:[%s321 + $0xc] sm:$0xf]
        %v358 = vunpack.c.l.bf16 %v354
        %v359 = vunpack.c.l.bf16 %v355
        %v360 = vunpack.c.l.bf16 %v356
        %v361 = vunpack.c.l.bf16 %v357
        %v362 = vlaneseq
        %v363 = vshrl.u32 %v362, 7
        %v364 = vadd.s32 %v363, 8
        %p365 = scmp.eq.s32.totalorder %s26, 0
        // Predicated region
        $region90: #{tpu_custom_call.1} parent=84 // pred_check
          %p366 = pneg %p365
        $region91: #{tpu_custom_call.1} parent=84 // pred_check_branch
          %368 = sbr.rel (%p366) target = $region93
        $region92: #{tpu_custom_call.1} parent=84 // pred_region
          %vm369 = vcmask 253952
          %370 = vst.msk [vmem:[#allocation2] sm:$0x1] %vm369, 0.0
          %371 = vst.msk [vmem:[#allocation2 + $0x1] sm:$0x1] %vm369, 0.0
          %372 = vst.msk [vmem:[#allocation3] sm:$0x1] %vm369, 0.0
          %373 = vst.msk [vmem:[#allocation3 + $0x1] sm:$0x1] %vm369, 0.0
        $region93: #{tpu_custom_call.1} parent=84 // pred_fallthru
          _
        %v374 = vld [vmem:[#allocation2] sm:$0x1]
        %v375 = vld [vmem:[#allocation2 + $0x1] sm:$0x1]
        %vm380 = vcmask 1040384
        %v381 = vrot.slane %v358, 7
        %v382 = vrot.slane %v359, 7
        %v383 = vsel %vm380, %v381, %v382
        %v384 = vrot.slane %v360, 7
        %v385 = vrot.slane %v361, 7
        %v386 = vsel %vm380, %v384, %v385
        %v393 = vsel %vm380, %v374, %v381
        %v394 = vsel %vm380, %v375, %v384
        %vm395 = vcmask 261127
        %396 = vst.msk [vmem:[#allocation2 - $0x7] sm:$0x80] %vm395, %v359
        %397 = vst.msk [vmem:[#allocation2 - $0x6] sm:$0x80] %vm395, %v361
        %v398 = vpack.c.bf16 %v383, %v393
        %v399 = vpack.c.bf16 %v382, %v382
        %v400 = vpack.c.bf16 %v386, %v394
        %v401 = vpack.c.bf16 %v385, %v385
        %v402 = vld [vmem:[%s1] sm:$0xf]
        %v403 = vld [vmem:[%s1 + $0x4] sm:$0xf]
        %v404 = vld [vmem:[%s1 + $0x8] sm:$0xf]
        %v405 = vld [vmem:[%s1 + $0xc] sm:$0xf]
        %vm406 = vsmask.f32 7424
        %v408 = vshrl.u32 %v398, 16
        %v410 = vshll.u32 %v398, 16
        %v412 = vrot.slane %v410, 1
        %v413 = vor.u32 %v408, %v412
        %v415 = vshll.u32 %v399, 16
        %v417 = vrot.slane %v415, 1
        %v418 = vsel %vm406, %v413, %v417
        %v420 = vshrl.u32 %v400, 16
        %v422 = vshll.u32 %v400, 16
        %v424 = vrot.slane %v422, 1
        %v425 = vor.u32 %v420, %v424
        %v427 = vshll.u32 %v401, 16
        %v429 = vrot.slane %v427, 1
        %v430 = vsel %vm406, %v425, %v429
        %v431 = vld [vmem:[%s1 + $0x10] sm:$0xf]
        %v432 = vld [vmem:[%s1 + $0x14] sm:$0xf]
        %v433 = vld [vmem:[%s1 + $0x18] sm:$0xf]
        %v434 = vld [vmem:[%s1 + $0x1c] sm:$0xf]
        %v439 = vunpack.c.l.b16 %v431
        %v440 = vunpack.c.l.b16 %v432
        %v441 = vunpack.c.l.b16 %v433
        %v442 = vunpack.c.l.b16 %v434
        %v443 = vpack.c.b16 %v440, %v439
        %v444 = vpack.c.b16 %v442, %v441
        %vm447 = vcmask 261120
        %v449 = vsel %vm447, %v418, 0
        %v452 = vsel %vm447, %v430, 0
        %454 = vmatprep.subr.bf16.mxu0 0
        %455 = vmatpush1.bf16.msra.mxu0 0
        %456 = vmatprep.subr.bf16.mxu0 0
        %457 = vmatpush1.bf16.msra.mxu0 0
        %458 = vmatprep.subr.bf16.mxu0 0
        %459 = vmatpush1.bf16.msra.mxu0 0
        %460 = vmatprep.subr.bf16.mxu0 0
        %461 = vmatpush1.bf16.msra.mxu0 0
        %462 = vmatprep.subr.bf16.mxu0 0
        %463 = vmatpush1.bf16.msra.mxu0 0
        %464 = vmatprep.subr.bf16.mxu0 0
        %465 = vmatpush1.bf16.msra.mxu0 0
        %466 = vmatprep.subr.bf16.mxu0 0
        %467 = vmatpush1.bf16.msra.mxu0 %v444
        %468 = vmatprep.subr.bf16.mxu0 0
        %469 = vmatpush1.bf16.msra.mxu0 %v443
        %470 = vmatprep.subr.bf16.mxu0 0
        %471 = vmatpush2.bf16.msra.mxu0 0
        %472 = vmatprep.subr.bf16.mxu0 0
        %473 = vmatpush2.bf16.msra.mxu0 0
        %474 = vmatprep.subr.bf16.mxu0 0
        %475 = vmatpush2.bf16.msra.mxu0 0
        %476 = vmatprep.subr.bf16.mxu0 0
        %477 = vmatpush2.bf16.msra.mxu0 0
        %478 = vmatprep.subr.bf16.mxu0 0
        %479 = vmatpush2.bf16.msra.mxu0 0
        %480 = vmatprep.subr.bf16.mxu0 0
        %481 = vmatpush2.bf16.msra.mxu0 0
        %482 = vmatprep.subr.bf16.mxu0 0
        %483 = vmatpush2.bf16.msra.mxu0 0
        %484 = vmatprep.subr.bf16.mxu0 0
        %485 = vmatpush2.bf16.msra.mxu0 0
        %486 = vmatprep.mubr.bf16.mxu0 0
        %487 = vmatmul.mubr.bf16.gmra.mxu0 %v449
        %v488 = vpop.f32.mrf.mxu0
        %v489 = vadd.f32 0.0, %v488
        %v490 = vpop.f32.mrf.mxu0
        %v491 = vpop.f32.mrf.mxu0
        %v492 = vadd.f32 0.0, %v491
        %v493 = vpop.f32.mrf.mxu0
        %494 = vmatprep.mubr.bf16.mxu0 0
        %495 = vmatmul.mubr.bf16.gmra.mxu0 %v452
        %v496 = vpop.f32.mrf.mxu0
        %v497 = vadd.f32 0.0, %v496
        %v498 = vpop.f32.mrf.mxu0
        %v499 = vpop.f32.mrf.mxu0
        %v500 = vadd.f32 0.0, %v499
        %v501 = vpop.f32.mrf.mxu0
        %502 = vdwg.mxu0
        %v507 = vunpack.c.l.b16 %v402
        %v508 = vunpack.c.l.b16 %v403
        %v509 = vunpack.c.l.b16 %v404
        %v510 = vunpack.c.l.b16 %v405
        %v511 = vpack.c.b16 %v508, %v507
        %v512 = vpack.c.b16 %v510, %v509
        %v515 = vsel %vm447, %v398, 0
        %v517 = vsel %vm447, %v400, 0
        %519 = vmatprep.subr.bf16.mxu0 0
        %520 = vmatpush1.bf16.msra.mxu0 0
        %521 = vmatprep.subr.bf16.mxu0 0
        %522 = vmatpush1.bf16.msra.mxu0 0
        %523 = vmatprep.subr.bf16.mxu0 0
        %524 = vmatpush1.bf16.msra.mxu0 0
        %525 = vmatprep.subr.bf16.mxu0 0
        %526 = vmatpush1.bf16.msra.mxu0 0
        %527 = vmatprep.subr.bf16.mxu0 0
        %528 = vmatpush1.bf16.msra.mxu0 0
        %529 = vmatprep.subr.bf16.mxu0 0
        %530 = vmatpush1.bf16.msra.mxu0 0
        %531 = vmatprep.subr.bf16.mxu0 0
        %532 = vmatpush1.bf16.msra.mxu0 %v512
        %533 = vmatprep.subr.bf16.mxu0 0
        %534 = vmatpush1.bf16.msra.mxu0 %v511
        %535 = vmatprep.subr.bf16.mxu0 0
        %536 = vmatpush2.bf16.msra.mxu0 0
        %537 = vmatprep.subr.bf16.mxu0 0
        %538 = vmatpush2.bf16.msra.mxu0 0
        %539 = vmatprep.subr.bf16.mxu0 0
        %540 = vmatpush2.bf16.msra.mxu0 0
        %541 = vmatprep.subr.bf16.mxu0 0
        %542 = vmatpush2.bf16.msra.mxu0 0
        %543 = vmatprep.subr.bf16.mxu0 0
        %544 = vmatpush2.bf16.msra.mxu0 0
        %545 = vmatprep.subr.bf16.mxu0 0
        %546 = vmatpush2.bf16.msra.mxu0 0
        %547 = vmatprep.subr.bf16.mxu0 0
        %548 = vmatpush2.bf16.msra.mxu0 0
        %549 = vmatprep.subr.bf16.mxu0 0
        %550 = vmatpush2.bf16.msra.mxu0 0
        %551 = vmatprep.mubr.bf16.mxu0 0
        %552 = vmatmul.mubr.bf16.gmra.mxu0 %v515
        %v553 = vpop.f32.mrf.mxu0
        %v554 = vadd.f32 %v489, %v553
        %v555 = vpop.f32.mrf.mxu0
        %v556 = vpop.f32.mrf.mxu0
        %v557 = vadd.f32 %v492, %v556
        %v558 = vpop.f32.mrf.mxu0
        %559 = vmatprep.mubr.bf16.mxu0 0
        %560 = vmatmul.mubr.bf16.gmra.mxu0 %v517
        %v561 = vpop.f32.mrf.mxu0
        %v562 = vadd.f32 %v497, %v561
        %v563 = vpop.f32.mrf.mxu0
        %v564 = vpop.f32.mrf.mxu0
        %v565 = vadd.f32 %v500, %v564
        %v566 = vpop.f32.mrf.mxu0
        %567 = vdwg.mxu0
        %v568 = vld [vmem:[%s2] sm:$0x1]
        %v570 = vlaneseq
        %v571 = vshrl.u32 %v570, 7
        %v572 = vsub.s32 0, %v571
        %v573 = vrot.slane %v568, %v572
        %v575 = vadd.f32 %v554, %v573
        %v576 = vadd.f32 %v557, %v573
        %v577 = vadd.f32 %v562, %v573
        %v578 = vadd.f32 %v565, %v573
        %v579 = vtanh.pop %v575
        %v580 = vtanh.pop %v576
        %v581 = vtanh.pop %v577
        %v582 = vtanh.pop %v578
        %v583 = vxor.u32 %v575, 2147483648
        %v584 = vxor.u32 %v576, 2147483648
        %v585 = vxor.u32 %v577, 2147483648
        %v586 = vxor.u32 %v578, 2147483648
        %v587 = vmul.f32 %v583, 1.442695
        %v588 = vpow.pop %v587
        %v589 = vmul.f32 %v584, 1.442695
        %v590 = vpow.pop %v589
        %v591 = vmul.f32 %v585, 1.442695
        %v592 = vpow.pop %v591
        %v593 = vmul.f32 %v586, 1.442695
        %v594 = vpow.pop %v593
        %v595 = vadd.f32 %v588, 1.0
        %v596 = vadd.f32 %v590, 1.0
        %v597 = vadd.f32 %v592, 1.0
        %v598 = vadd.f32 %v594, 1.0
        %v599 = vrcp.pop %v595
        %v600 = vmul.f32 1.0, %v599
        %v601 = vrcp.pop %v596
        %v602 = vmul.f32 1.0, %v601
        %v603 = vrcp.pop %v597
        %v604 = vmul.f32 1.0, %v603
        %v605 = vrcp.pop %v598
        %v606 = vmul.f32 1.0, %v605
        %v607 = vsub.f32 1.0, %v600
        %v608 = vsub.f32 1.0, %v602
        %v609 = vsub.f32 1.0, %v604
        %v610 = vsub.f32 1.0, %v606
        %615 = vrot.lane.b32.xlu0 %v579, 32
        %v616 = vpop.permute.xlu0 %615
        %617 = vrot.lane.b32.xlu0 %v580, 32
        %v618 = vpop.permute.xlu0 %617
        %619 = vrot.lane.b32.xlu0 %v581, 32
        %v620 = vpop.permute.xlu0 %619
        %621 = vrot.lane.b32.xlu0 %v582, 32
        %v622 = vpop.permute.xlu0 %621
        %v627 = vmul.f32 %v607, %v616
        %v628 = vmul.f32 %v608, %v618
        %v629 = vmul.f32 %v609, %v620
        %v630 = vmul.f32 %v610, %v622
        %635 = vrot.lane.b32.xlu0 %v627, 96
        %v636 = vpop.permute.xlu0 %635
        %637 = vrot.lane.b32.xlu0 %v628, 96
        %v638 = vpop.permute.xlu0 %637
        %639 = vrot.lane.b32.xlu0 %v629, 96
        %v640 = vpop.permute.xlu0 %639
        %641 = vrot.lane.b32.xlu0 %v630, 96
        %v642 = vpop.permute.xlu0 %641
        %v647 = vrot.slane %v636, 7
        %v648 = vrot.slane %v638, 7
        %v649 = vrot.slane %v640, 7
        %v650 = vrot.slane %v642, 7
        %vm651 = vcmp.lt.s32.totalorder %v363, 1
        %v652 = vsel %vm651, %v649, %v650
        %v653 = vsel %vm651, %v648, %v649
        %v654 = vsel %vm651, %v647, %v648
        %v655 = vsel %vm651, %v650, %v647
        %vm656 = vcmp.ge.s32.totalorder %v363, 1
        %vm657 = vcmp.ge.s32.totalorder %v364, 1
        %v658 = vsel %vm656, %v655, 0.0
        %v659 = vsel %vm657, %v654, 0.0
        %v660 = vsel %vm656, %v653, 0.0
        %v661 = vsel %vm657, %v652, 0.0
        %666 = vrot.lane.b32.xlu0 %v658, 32
        %v667 = vpop.permute.xlu0 %666
        %668 = vrot.lane.b32.xlu0 %v659, 32
        %v669 = vpop.permute.xlu0 %668
        %670 = vrot.lane.b32.xlu0 %v660, 32
        %v671 = vpop.permute.xlu0 %670
        %672 = vrot.lane.b32.xlu0 %v661, 32
        %v673 = vpop.permute.xlu0 %672
        %v678 = vmul.f32 %v600, %v667
        %v679 = vmul.f32 %v602, %v669
        %v680 = vmul.f32 %v604, %v671
        %v681 = vmul.f32 %v606, %v673
        %v682 = vadd.f32 %v678, %v627
        %v683 = vadd.f32 %v679, %v628
        %v684 = vadd.f32 %v680, %v629
        %v685 = vadd.f32 %v681, %v630
        %690 = vrot.lane.b32.xlu0 %v600, 96
        %v691 = vpop.permute.xlu0 %690
        %692 = vrot.lane.b32.xlu0 %v602, 96
        %v693 = vpop.permute.xlu0 %692
        %694 = vrot.lane.b32.xlu0 %v604, 96
        %v695 = vpop.permute.xlu0 %694
        %696 = vrot.lane.b32.xlu0 %v606, 96
        %v697 = vpop.permute.xlu0 %696
        %v702 = vrot.slane %v691, 7
        %v703 = vrot.slane %v693, 7
        %v704 = vrot.slane %v695, 7
        %v705 = vrot.slane %v697, 7
        %v706 = vsel %vm651, %v704, %v705
        %v707 = vsel %vm651, %v703, %v704
        %v708 = vsel %vm651, %v702, %v703
        %v709 = vsel %vm651, %v705, %v702
        %v710 = vsel %vm656, %v709, 1.0
        %v711 = vsel %vm657, %v708, 1.0
        %v712 = vsel %vm656, %v707, 1.0
        %v713 = vsel %vm657, %v706, 1.0
        %718 = vrot.lane.b32.xlu0 %v710, 32
        %v719 = vpop.permute.xlu0 %718
        %720 = vrot.lane.b32.xlu0 %v711, 32
        %v721 = vpop.permute.xlu0 %720
        %722 = vrot.lane.b32.xlu0 %v712, 32
        %v723 = vpop.permute.xlu0 %722
        %724 = vrot.lane.b32.xlu0 %v713, 32
        %v725 = vpop.permute.xlu0 %724
        %v730 = vmul.f32 %v600, %v719
        %v731 = vmul.f32 %v602, %v721
        %v732 = vmul.f32 %v604, %v723
        %v733 = vmul.f32 %v606, %v725
        %738 = vrot.lane.b32.xlu0 %v682, 96
        %v739 = vpop.permute.xlu0 %738
        %740 = vrot.lane.b32.xlu0 %v683, 96
        %v741 = vpop.permute.xlu0 %740
        %742 = vrot.lane.b32.xlu0 %v684, 96
        %v743 = vpop.permute.xlu0 %742
        %744 = vrot.lane.b32.xlu0 %v685, 96
        %v745 = vpop.permute.xlu0 %744
        %v750 = vrot.slane %v739, 6
        %v751 = vrot.slane %v741, 6
        %v752 = vrot.slane %v743, 6
        %v753 = vrot.slane %v745, 6
        %vm754 = vcmp.lt.s32.totalorder %v363, 2
        %v755 = vsel %vm754, %v752, %v753
        %v756 = vsel %vm754, %v751, %v752
        %v757 = vsel %vm754, %v750, %v751
        %v758 = vsel %vm754, %v753, %v750
        %vm759 = vcmp.ge.s32.totalorder %v363, 2
        %vm760 = vcmp.ge.s32.totalorder %v364, 2
        %v761 = vsel %vm759, %v758, 0.0
        %v762 = vsel %vm760, %v757, 0.0
        %v763 = vsel %vm759, %v756, 0.0
        %v764 = vsel %vm760, %v755, 0.0
        %769 = vrot.lane.b32.xlu0 %v761, 32
        %v770 = vpop.permute.xlu0 %769
        %771 = vrot.lane.b32.xlu0 %v762, 32
        %v772 = vpop.permute.xlu0 %771
        %773 = vrot.lane.b32.xlu0 %v763, 32
        %v774 = vpop.permute.xlu0 %773
        %775 = vrot.lane.b32.xlu0 %v764, 32
        %v776 = vpop.permute.xlu0 %775
        %v781 = vmul.f32 %v730, %v770
        %v782 = vmul.f32 %v731, %v772
        %v783 = vmul.f32 %v732, %v774
        %v784 = vmul.f32 %v733, %v776
        %v785 = vadd.f32 %v781, %v682
        %v786 = vadd.f32 %v782, %v683
        %v787 = vadd.f32 %v783, %v684
        %v788 = vadd.f32 %v784, %v685
        %793 = vrot.lane.b32.xlu0 %v730, 96
        %v794 = vpop.permute.xlu0 %793
        %795 = vrot.lane.b32.xlu0 %v731, 96
        %v796 = vpop.permute.xlu0 %795
        %797 = vrot.lane.b32.xlu0 %v732, 96
        %v798 = vpop.permute.xlu0 %797
        %799 = vrot.lane.b32.xlu0 %v733, 96
        %v800 = vpop.permute.xlu0 %799
        %v805 = vrot.slane %v794, 6
        %v806 = vrot.slane %v796, 6
        %v807 = vrot.slane %v798, 6
        %v808 = vrot.slane %v800, 6
        %v809 = vsel %vm754, %v807, %v808
        %v810 = vsel %vm754, %v806, %v807
        %v811 = vsel %vm754, %v805, %v806
        %v812 = vsel %vm754, %v808, %v805
        %v813 = vsel %vm759, %v812, 1.0
        %v814 = vsel %vm760, %v811, 1.0
        %v815 = vsel %vm759, %v810, 1.0
        %v816 = vsel %vm760, %v809, 1.0
        %821 = vrot.lane.b32.xlu0 %v813, 32
        %v822 = vpop.permute.xlu0 %821
        %823 = vrot.lane.b32.xlu0 %v814, 32
        %v824 = vpop.permute.xlu0 %823
        %825 = vrot.lane.b32.xlu0 %v815, 32
        %v826 = vpop.permute.xlu0 %825
        %827 = vrot.lane.b32.xlu0 %v816, 32
        %v828 = vpop.permute.xlu0 %827
        %v833 = vmul.f32 %v730, %v822
        %v834 = vmul.f32 %v731, %v824
        %v835 = vmul.f32 %v732, %v826
        %v836 = vmul.f32 %v733, %v828
        %841 = vrot.lane.b32.xlu0 %v785, 96
        %v842 = vpop.permute.xlu0 %841
        %843 = vrot.lane.b32.xlu0 %v786, 96
        %v844 = vpop.permute.xlu0 %843
        %845 = vrot.lane.b32.xlu0 %v787, 96
        %v846 = vpop.permute.xlu0 %845
        %847 = vrot.lane.b32.xlu0 %v788, 96
        %v848 = vpop.permute.xlu0 %847
        %v853 = vrot.slane %v842, 4
        %v854 = vrot.slane %v844, 4
        %v855 = vrot.slane %v846, 4
        %v856 = vrot.slane %v848, 4
        %vm857 = vcmp.lt.s32.totalorder %v363, 4
        %v858 = vsel %vm857, %v855, %v856
        %v859 = vsel %vm857, %v854, %v855
        %v860 = vsel %vm857, %v853, %v854
        %v861 = vsel %vm857, %v856, %v853
        %vm862 = vcmp.ge.s32.totalorder %v363, 4
        %vm863 = vcmp.ge.s32.totalorder %v364, 4
        %v864 = vsel %vm862, %v861, 0.0
        %v865 = vsel %vm863, %v860, 0.0
        %v866 = vsel %vm862, %v859, 0.0
        %v867 = vsel %vm863, %v858, 0.0
        %872 = vrot.lane.b32.xlu0 %v864, 32
        %v873 = vpop.permute.xlu0 %872
        %874 = vrot.lane.b32.xlu0 %v865, 32
        %v875 = vpop.permute.xlu0 %874
        %876 = vrot.lane.b32.xlu0 %v866, 32
        %v877 = vpop.permute.xlu0 %876
        %878 = vrot.lane.b32.xlu0 %v867, 32
        %v879 = vpop.permute.xlu0 %878
        %v884 = vmul.f32 %v833, %v873
        %v885 = vmul.f32 %v834, %v875
        %v886 = vmul.f32 %v835, %v877
        %v887 = vmul.f32 %v836, %v879
        %v888 = vadd.f32 %v884, %v785
        %v889 = vadd.f32 %v885, %v786
        %v890 = vadd.f32 %v886, %v787
        %v891 = vadd.f32 %v887, %v788
        %896 = vrot.lane.b32.xlu0 %v833, 96
        %v897 = vpop.permute.xlu0 %896
        %898 = vrot.lane.b32.xlu0 %v834, 96
        %v899 = vpop.permute.xlu0 %898
        %900 = vrot.lane.b32.xlu0 %v835, 96
        %v901 = vpop.permute.xlu0 %900
        %902 = vrot.lane.b32.xlu0 %v836, 96
        %v903 = vpop.permute.xlu0 %902
        %v908 = vrot.slane %v897, 4
        %v909 = vrot.slane %v899, 4
        %v910 = vrot.slane %v901, 4
        %v911 = vrot.slane %v903, 4
        %v912 = vsel %vm857, %v910, %v911
        %v913 = vsel %vm857, %v909, %v910
        %v914 = vsel %vm857, %v908, %v909
        %v915 = vsel %vm857, %v911, %v908
        %v916 = vsel %vm862, %v915, 1.0
        %v917 = vsel %vm863, %v914, 1.0
        %v918 = vsel %vm862, %v913, 1.0
        %v919 = vsel %vm863, %v912, 1.0
        %924 = vrot.lane.b32.xlu0 %v916, 32
        %v925 = vpop.permute.xlu0 %924
        %926 = vrot.lane.b32.xlu0 %v917, 32
        %v927 = vpop.permute.xlu0 %926
        %928 = vrot.lane.b32.xlu0 %v918, 32
        %v929 = vpop.permute.xlu0 %928
        %930 = vrot.lane.b32.xlu0 %v919, 32
        %v931 = vpop.permute.xlu0 %930
        %v936 = vmul.f32 %v833, %v925
        %v937 = vmul.f32 %v834, %v927
        %v938 = vmul.f32 %v835, %v929
        %v939 = vmul.f32 %v836, %v931
        %944 = vrot.lane.b32.xlu0 %v888, 96
        %v945 = vpop.permute.xlu0 %944
        %946 = vrot.lane.b32.xlu0 %v889, 96
        %v947 = vpop.permute.xlu0 %946
        %948 = vrot.lane.b32.xlu0 %v890, 96
        %v949 = vpop.permute.xlu0 %948
        %950 = vrot.lane.b32.xlu0 %v891, 96
        %v951 = vpop.permute.xlu0 %950
        %vm956 = vcmp.ge.s32.totalorder %v363, 8
        %vm957 = vcmp.ge.s32.totalorder %v364, 8
        %v958 = vsel %vm956, %v951, 0.0
        %v959 = vsel %vm957, %v945, 0.0
        %v960 = vsel %vm956, %v947, 0.0
        %v961 = vsel %vm957, %v949, 0.0
        %966 = vrot.lane.b32.xlu0 %v958, 32
        %v967 = vpop.permute.xlu0 %966
        %968 = vrot.lane.b32.xlu0 %v959, 32
        %v969 = vpop.permute.xlu0 %968
        %970 = vrot.lane.b32.xlu0 %v960, 32
        %v971 = vpop.permute.xlu0 %970
        %972 = vrot.lane.b32.xlu0 %v961, 32
        %v973 = vpop.permute.xlu0 %972
        %v978 = vmul.f32 %v936, %v967
        %v979 = vmul.f32 %v937, %v969
        %v980 = vmul.f32 %v938, %v971
        %v981 = vmul.f32 %v939, %v973
        %v982 = vadd.f32 %v978, %v888
        %v983 = vadd.f32 %v979, %v889
        %v984 = vadd.f32 %v980, %v890
        %v985 = vadd.f32 %v981, %v891
        %990 = vrot.lane.b32.xlu0 %v936, 96
        %v991 = vpop.permute.xlu0 %990
        %992 = vrot.lane.b32.xlu0 %v937, 96
        %v993 = vpop.permute.xlu0 %992
        %994 = vrot.lane.b32.xlu0 %v938, 96
        %v995 = vpop.permute.xlu0 %994
        %996 = vrot.lane.b32.xlu0 %v939, 96
        %v997 = vpop.permute.xlu0 %996
        %v1002 = vsel %vm956, %v997, 1.0
        %v1003 = vsel %vm957, %v991, 1.0
        %v1004 = vsel %vm956, %v993, 1.0
        %v1005 = vsel %vm957, %v995, 1.0
        %1010 = vrot.lane.b32.xlu0 %v1002, 32
        %v1011 = vpop.permute.xlu0 %1010
        %1012 = vrot.lane.b32.xlu0 %v1003, 32
        %v1013 = vpop.permute.xlu0 %1012
        %1014 = vrot.lane.b32.xlu0 %v1004, 32
        %v1015 = vpop.permute.xlu0 %1014
        %1016 = vrot.lane.b32.xlu0 %v1005, 32
        %v1017 = vpop.permute.xlu0 %1016
        %v1022 = vmul.f32 %v936, %v1011
        %v1023 = vmul.f32 %v937, %v1013
        %v1024 = vmul.f32 %v938, %v1015
        %v1025 = vmul.f32 %v939, %v1017
        %v1026 = vld [vmem:[#allocation3] sm:$0x1]
        %v1027 = vld [vmem:[#allocation3 + $0x1] sm:$0x1]
        %v1030 = vlaneseq
        %v1031 = vshrl.u32 %v1030, 7
        %v1032 = vsub.s32 0, %v1031
        %v1033 = vrot.slane %v1026, %v1032
        %v1034 = vlaneseq
        %v1035 = vshrl.u32 %v1034, 7
        %v1036 = vsub.s32 0, %v1035
        %v1037 = vrot.slane %v1027, %v1036
        %1038 = vrot.lane.b32.xlu0 %v1033, 32
        %v1039 = vpop.permute.xlu0 %1038
        %1040 = vrot.lane.b32.xlu0 %v1037, 32
        %v1041 = vpop.permute.xlu0 %1040
        %v1044 = vmul.f32 %v1022, %v1039
        %v1045 = vmul.f32 %v1023, %v1039
        %v1046 = vmul.f32 %v1024, %v1041
        %v1047 = vmul.f32 %v1025, %v1041
        %v1048 = vadd.f32 %v1044, %v982
        %v1049 = vadd.f32 %v1045, %v983
        %v1050 = vadd.f32 %v1046, %v984
        %v1051 = vadd.f32 %v1047, %v985
        %1054 = vrot.lane.b32.xlu0 %v1049, 96
        %v1055 = vpop.permute.xlu0 %1054
        %1056 = vrot.lane.b32.xlu0 %v1051, 96
        %v1057 = vpop.permute.xlu0 %1056
        %1060 = vst.msk [vmem:[#allocation3 - $0x7] sm:$0x80] %vm395, %v1055
        %1061 = vst.msk [vmem:[#allocation3 - $0x6] sm:$0x80] %vm395, %v1057
        %1064 = vrot.lane.b32.xlu0 %v1048, 32
        %v1065 = vpop.permute.xlu0 %1064
        %1066 = vrot.lane.b32.xlu0 %v1049, 32
        %v1067 = vpop.permute.xlu0 %1066
        %1068 = vrot.lane.b32.xlu0 %v1050, 32
        %v1069 = vpop.permute.xlu0 %1068
        %1070 = vrot.lane.b32.xlu0 %v1051, 32
        %v1071 = vpop.permute.xlu0 %1070
        %v1076 = vmul.f32 %v600, %v1065
        %v1077 = vmul.f32 %v602, %v1067
        %v1078 = vmul.f32 %v604, %v1069
        %v1079 = vmul.f32 %v606, %v1071
        // Predicated region
        $region94: #{tpu_custom_call.1} parent=84 // pred_check
          %p1080 = pneg %p365
        $region95: #{tpu_custom_call.1} parent=84 // pred_check_branch
          %1082 = sbr.rel (%p1080) target = $region97
        $region96: #{tpu_custom_call.1} parent=84 // pred_region
          %vm1083 = vcmask 253952
          %1084 = vst.msk [vmem:[#allocation4] sm:$0x1] %vm1083, 0.0
          %1085 = vst.msk [vmem:[#allocation4 + $0x1] sm:$0x1] %vm1083, 0.0
          %1086 = vst.msk [vmem:[#allocation5] sm:$0x1] %vm1083, 0.0
          %1087 = vst.msk [vmem:[#allocation5 + $0x1] sm:$0x1] %vm1083, 0.0
        $region97: #{tpu_custom_call.1} parent=84 // pred_fallthru
          _
        %v1088 = vld [vmem:[#allocation4] sm:$0x1]
        %v1089 = vld [vmem:[#allocation4 + $0x1] sm:$0x1]
        %v1094 = vrot.slane %v1076, 7
        %v1095 = vrot.slane %v1077, 7
        %v1096 = vsel %vm380, %v1094, %v1095
        %v1097 = vrot.slane %v1078, 7
        %v1098 = vrot.slane %v1079, 7
        %v1099 = vsel %vm380, %v1097, %v1098
        %1100 = vrot.lane.b32.xlu0 %v1094, 64
        %v1101 = vpop.permute.xlu0 %1100
        %1102 = vrot.lane.b32.xlu0 %v1096, 64
        %v1103 = vpop.permute.xlu0 %1102
        %1104 = vrot.lane.b32.xlu0 %v1095, 64
        %v1105 = vpop.permute.xlu0 %1104
        %1106 = vrot.lane.b32.xlu0 %v1097, 64
        %v1107 = vpop.permute.xlu0 %1106
        %1108 = vrot.lane.b32.xlu0 %v1099, 64
        %v1109 = vpop.permute.xlu0 %1108
        %1110 = vrot.lane.b32.xlu0 %v1098, 64
        %v1111 = vpop.permute.xlu0 %1110
        %v1118 = vsel %vm380, %v1088, %v1101
        %v1119 = vsel %vm380, %v1089, %v1107
        %1120 = vrot.lane.b32.xlu0 %v1077, 64
        %v1121 = vpop.permute.xlu0 %1120
        %1122 = vrot.lane.b32.xlu0 %v1079, 64
        %v1123 = vpop.permute.xlu0 %1122
        %1126 = vst.msk [vmem:[#allocation4 - $0x7] sm:$0x80] %vm395, %v1121
        %1127 = vst.msk [vmem:[#allocation4 - $0x6] sm:$0x80] %vm395, %v1123
        %v1128 = vpack.c.bf16 %v1103, %v1118
        %v1129 = vpack.c.bf16 %v1105, %v1105
        %v1130 = vpack.c.bf16 %v1109, %v1119
        %v1131 = vpack.c.bf16 %v1111, %v1111
        %v1132 = vld [vmem:[%s3] sm:$0xf]
        %v1133 = vld [vmem:[%s3 + $0x4] sm:$0xf]
        %v1134 = vld [vmem:[%s3 + $0x8] sm:$0xf]
        %v1135 = vld [vmem:[%s3 + $0xc] sm:$0xf]
        %v1137 = vshrl.u32 %v1128, 16
        %v1139 = vshll.u32 %v1128, 16
        %v1141 = vrot.slane %v1139, 1
        %v1142 = vor.u32 %v1137, %v1141
        %v1144 = vshll.u32 %v1129, 16
        %v1146 = vrot.slane %v1144, 1
        %v1147 = vsel %vm406, %v1142, %v1146
        %v1149 = vshrl.u32 %v1130, 16
        %v1151 = vshll.u32 %v1130, 16
        %v1153 = vrot.slane %v1151, 1
        %v1154 = vor.u32 %v1149, %v1153
        %v1156 = vshll.u32 %v1131, 16
        %v1158 = vrot.slane %v1156, 1
        %v1159 = vsel %vm406, %v1154, %v1158
        %v1160 = vld [vmem:[%s3 + $0x10] sm:$0xf]
        %v1161 = vld [vmem:[%s3 + $0x14] sm:$0xf]
        %v1162 = vld [vmem:[%s3 + $0x18] sm:$0xf]
        %v1163 = vld [vmem:[%s3 + $0x1c] sm:$0xf]
        %v1168 = vunpack.c.l.b16 %v1160
        %v1169 = vunpack.c.l.b16 %v1161
        %v1170 = vunpack.c.l.b16 %v1162
        %v1171 = vunpack.c.l.b16 %v1163
        %v1172 = vpack.c.b16 %v1169, %v1168
        %v1173 = vpack.c.b16 %v1171, %v1170
        %v1177 = vsel %vm447, %v1147, 0
        %v1180 = vsel %vm447, %v1159, 0
        %1182 = vmatprep.subr.bf16.mxu0 0
        %1183 = vmatpush1.bf16.msra.mxu0 0
        %1184 = vmatprep.subr.bf16.mxu0 0
        %1185 = vmatpush1.bf16.msra.mxu0 0
        %1186 = vmatprep.subr.bf16.mxu0 0
        %1187 = vmatpush1.bf16.msra.mxu0 0
        %1188 = vmatprep.subr.bf16.mxu0 0
        %1189 = vmatpush1.bf16.msra.mxu0 0
        %1190 = vmatprep.subr.bf16.mxu0 0
        %1191 = vmatpush1.bf16.msra.mxu0 0
        %1192 = vmatprep.subr.bf16.mxu0 0
        %1193 = vmatpush1.bf16.msra.mxu0 0
        %1194 = vmatprep.subr.bf16.mxu0 0
        %1195 = vmatpush1.bf16.msra.mxu0 %v1173
        %1196 = vmatprep.subr.bf16.mxu0 0
        %1197 = vmatpush1.bf16.msra.mxu0 %v1172
        %1198 = vmatprep.subr.bf16.mxu0 0
        %1199 = vmatpush2.bf16.msra.mxu0 0
        %1200 = vmatprep.subr.bf16.mxu0 0
        %1201 = vmatpush2.bf16.msra.mxu0 0
        %1202 = vmatprep.subr.bf16.mxu0 0
        %1203 = vmatpush2.bf16.msra.mxu0 0
        %1204 = vmatprep.subr.bf16.mxu0 0
        %1205 = vmatpush2.bf16.msra.mxu0 0
        %1206 = vmatprep.subr.bf16.mxu0 0
        %1207 = vmatpush2.bf16.msra.mxu0 0
        %1208 = vmatprep.subr.bf16.mxu0 0
        %1209 = vmatpush2.bf16.msra.mxu0 0
        %1210 = vmatprep.subr.bf16.mxu0 0
        %1211 = vmatpush2.bf16.msra.mxu0 0
        %1212 = vmatprep.subr.bf16.mxu0 0
        %1213 = vmatpush2.bf16.msra.mxu0 0
        %1214 = vmatprep.mubr.bf16.mxu0 0
        %1215 = vmatmul.mubr.bf16.gmra.mxu0 %v1177
        %v1216 = vpop.f32.mrf.mxu0
        %v1217 = vadd.f32 0.0, %v1216
        %v1218 = vpop.f32.mrf.mxu0
        %v1219 = vpop.f32.mrf.mxu0
        %v1220 = vadd.f32 0.0, %v1219
        %v1221 = vpop.f32.mrf.mxu0
        %1222 = vmatprep.mubr.bf16.mxu0 0
        %1223 = vmatmul.mubr.bf16.gmra.mxu0 %v1180
        %v1224 = vpop.f32.mrf.mxu0
        %v1225 = vadd.f32 0.0, %v1224
        %v1226 = vpop.f32.mrf.mxu0
        %v1227 = vpop.f32.mrf.mxu0
        %v1228 = vadd.f32 0.0, %v1227
        %v1229 = vpop.f32.mrf.mxu0
        %1230 = vdwg.mxu0
        %v1235 = vunpack.c.l.b16 %v1132
        %v1236 = vunpack.c.l.b16 %v1133
        %v1237 = vunpack.c.l.b16 %v1134
        %v1238 = vunpack.c.l.b16 %v1135
        %v1239 = vpack.c.b16 %v1236, %v1235
        %v1240 = vpack.c.b16 %v1238, %v1237
        %v1243 = vsel %vm447, %v1128, 0
        %v1245 = vsel %vm447, %v1130, 0
        %1247 = vmatprep.subr.bf16.mxu0 0
        %1248 = vmatpush1.bf16.msra.mxu0 0
        %1249 = vmatprep.subr.bf16.mxu0 0
        %1250 = vmatpush1.bf16.msra.mxu0 0
        %1251 = vmatprep.subr.bf16.mxu0 0
        %1252 = vmatpush1.bf16.msra.mxu0 0
        %1253 = vmatprep.subr.bf16.mxu0 0
        %1254 = vmatpush1.bf16.msra.mxu0 0
        %1255 = vmatprep.subr.bf16.mxu0 0
        %1256 = vmatpush1.bf16.msra.mxu0 0
        %1257 = vmatprep.subr.bf16.mxu0 0
        %1258 = vmatpush1.bf16.msra.mxu0 0
        %1259 = vmatprep.subr.bf16.mxu0 0
        %1260 = vmatpush1.bf16.msra.mxu0 %v1240
        %1261 = vmatprep.subr.bf16.mxu0 0
        %1262 = vmatpush1.bf16.msra.mxu0 %v1239
        %1263 = vmatprep.subr.bf16.mxu0 0
        %1264 = vmatpush2.bf16.msra.mxu0 0
        %1265 = vmatprep.subr.bf16.mxu0 0
        %1266 = vmatpush2.bf16.msra.mxu0 0
        %1267 = vmatprep.subr.bf16.mxu0 0
        %1268 = vmatpush2.bf16.msra.mxu0 0
        %1269 = vmatprep.subr.bf16.mxu0 0
        %1270 = vmatpush2.bf16.msra.mxu0 0
        %1271 = vmatprep.subr.bf16.mxu0 0
        %1272 = vmatpush2.bf16.msra.mxu0 0
        %1273 = vmatprep.subr.bf16.mxu0 0
        %1274 = vmatpush2.bf16.msra.mxu0 0
        %1275 = vmatprep.subr.bf16.mxu0 0
        %1276 = vmatpush2.bf16.msra.mxu0 0
        %1277 = vmatprep.subr.bf16.mxu0 0
        %1278 = vmatpush2.bf16.msra.mxu0 0
        %1279 = vmatprep.mubr.bf16.mxu0 0
        %1280 = vmatmul.mubr.bf16.gmra.mxu0 %v1243
        %v1281 = vpop.f32.mrf.mxu0
        %v1282 = vadd.f32 %v1217, %v1281
        %v1283 = vpop.f32.mrf.mxu0
        %v1284 = vpop.f32.mrf.mxu0
        %v1285 = vadd.f32 %v1220, %v1284
        %v1286 = vpop.f32.mrf.mxu0
        %1287 = vmatprep.mubr.bf16.mxu0 0
        %1288 = vmatmul.mubr.bf16.gmra.mxu0 %v1245
        %v1289 = vpop.f32.mrf.mxu0
        %v1290 = vadd.f32 %v1225, %v1289
        %v1291 = vpop.f32.mrf.mxu0
        %v1292 = vpop.f32.mrf.mxu0
        %v1293 = vadd.f32 %v1228, %v1292
        %v1294 = vpop.f32.mrf.mxu0
        %1295 = vdwg.mxu0
        %v1296 = vld [vmem:[%s4] sm:$0x1]
        %v1298 = vlaneseq
        %v1299 = vshrl.u32 %v1298, 7
        %v1300 = vsub.s32 0, %v1299
        %v1301 = vrot.slane %v1296, %v1300
        %v1303 = vadd.f32 %v1282, %v1301
        %v1304 = vadd.f32 %v1285, %v1301
        %v1305 = vadd.f32 %v1290, %v1301
        %v1306 = vadd.f32 %v1293, %v1301
        %v1307 = vtanh.pop %v1303
        %v1308 = vtanh.pop %v1304
        %v1309 = vtanh.pop %v1305
        %v1310 = vtanh.pop %v1306
        %v1311 = vxor.u32 %v1303, 2147483648
        %v1312 = vxor.u32 %v1304, 2147483648
        %v1313 = vxor.u32 %v1305, 2147483648
        %v1314 = vxor.u32 %v1306, 2147483648
        %v1315 = vmul.f32 %v1311, 1.442695
        %v1316 = vpow.pop %v1315
        %v1317 = vmul.f32 %v1312, 1.442695
        %v1318 = vpow.pop %v1317
        %v1319 = vmul.f32 %v1313, 1.442695
        %v1320 = vpow.pop %v1319
        %v1321 = vmul.f32 %v1314, 1.442695
        %v1322 = vpow.pop %v1321
        %v1323 = vadd.f32 %v1316, 1.0
        %v1324 = vadd.f32 %v1318, 1.0
        %v1325 = vadd.f32 %v1320, 1.0
        %v1326 = vadd.f32 %v1322, 1.0
        %v1327 = vrcp.pop %v1323
        %v1328 = vmul.f32 1.0, %v1327
        %v1329 = vrcp.pop %v1324
        %v1330 = vmul.f32 1.0, %v1329
        %v1331 = vrcp.pop %v1325
        %v1332 = vmul.f32 1.0, %v1331
        %v1333 = vrcp.pop %v1326
        %v1334 = vmul.f32 1.0, %v1333
        %v1335 = vsub.f32 1.0, %v1328
        %v1336 = vsub.f32 1.0, %v1330
        %v1337 = vsub.f32 1.0, %v1332
        %v1338 = vsub.f32 1.0, %v1334
        %1343 = vrot.lane.b32.xlu0 %v1307, 32
        %v1344 = vpop.permute.xlu0 %1343
        %1345 = vrot.lane.b32.xlu0 %v1308, 32
        %v1346 = vpop.permute.xlu0 %1345
        %1347 = vrot.lane.b32.xlu0 %v1309, 32
        %v1348 = vpop.permute.xlu0 %1347
        %1349 = vrot.lane.b32.xlu0 %v1310, 32
        %v1350 = vpop.permute.xlu0 %1349
        %v1355 = vmul.f32 %v1335, %v1344
        %v1356 = vmul.f32 %v1336, %v1346
        %v1357 = vmul.f32 %v1337, %v1348
        %v1358 = vmul.f32 %v1338, %v1350
        %1363 = vrot.lane.b32.xlu0 %v1355, 96
        %v1364 = vpop.permute.xlu0 %1363
        %1365 = vrot.lane.b32.xlu0 %v1356, 96
        %v1366 = vpop.permute.xlu0 %1365
        %1367 = vrot.lane.b32.xlu0 %v1357, 96
        %v1368 = vpop.permute.xlu0 %1367
        %1369 = vrot.lane.b32.xlu0 %v1358, 96
        %v1370 = vpop.permute.xlu0 %1369
        %v1375 = vrot.slane %v1364, 7
        %v1376 = vrot.slane %v1366, 7
        %v1377 = vrot.slane %v1368, 7
        %v1378 = vrot.slane %v1370, 7
        %v1379 = vsel %vm651, %v1377, %v1378
        %v1380 = vsel %vm651, %v1376, %v1377
        %v1381 = vsel %vm651, %v1375, %v1376
        %v1382 = vsel %vm651, %v1378, %v1375
        %v1383 = vsel %vm656, %v1382, 0.0
        %v1384 = vsel %vm657, %v1381, 0.0
        %v1385 = vsel %vm656, %v1380, 0.0
        %v1386 = vsel %vm657, %v1379, 0.0
        %1391 = vrot.lane.b32.xlu0 %v1383, 32
        %v1392 = vpop.permute.xlu0 %1391
        %1393 = vrot.lane.b32.xlu0 %v1384, 32
        %v1394 = vpop.permute.xlu0 %1393
        %1395 = vrot.lane.b32.xlu0 %v1385, 32
        %v1396 = vpop.permute.xlu0 %1395
        %1397 = vrot.lane.b32.xlu0 %v1386, 32
        %v1398 = vpop.permute.xlu0 %1397
        %v1403 = vmul.f32 %v1328, %v1392
        %v1404 = vmul.f32 %v1330, %v1394
        %v1405 = vmul.f32 %v1332, %v1396
        %v1406 = vmul.f32 %v1334, %v1398
        %v1407 = vadd.f32 %v1403, %v1355
        %v1408 = vadd.f32 %v1404, %v1356
        %v1409 = vadd.f32 %v1405, %v1357
        %v1410 = vadd.f32 %v1406, %v1358
        %1415 = vrot.lane.b32.xlu0 %v1328, 96
        %v1416 = vpop.permute.xlu0 %1415
        %1417 = vrot.lane.b32.xlu0 %v1330, 96
        %v1418 = vpop.permute.xlu0 %1417
        %1419 = vrot.lane.b32.xlu0 %v1332, 96
        %v1420 = vpop.permute.xlu0 %1419
        %1421 = vrot.lane.b32.xlu0 %v1334, 96
        %v1422 = vpop.permute.xlu0 %1421
        %v1427 = vrot.slane %v1416, 7
        %v1428 = vrot.slane %v1418, 7
        %v1429 = vrot.slane %v1420, 7
        %v1430 = vrot.slane %v1422, 7
        %v1431 = vsel %vm651, %v1429, %v1430
        %v1432 = vsel %vm651, %v1428, %v1429
        %v1433 = vsel %vm651, %v1427, %v1428
        %v1434 = vsel %vm651, %v1430, %v1427
        %v1435 = vsel %vm656, %v1434, 1.0
        %v1436 = vsel %vm657, %v1433, 1.0
        %v1437 = vsel %vm656, %v1432, 1.0
        %v1438 = vsel %vm657, %v1431, 1.0
        %1443 = vrot.lane.b32.xlu0 %v1435, 32
        %v1444 = vpop.permute.xlu0 %1443
        %1445 = vrot.lane.b32.xlu0 %v1436, 32
        %v1446 = vpop.permute.xlu0 %1445
        %1447 = vrot.lane.b32.xlu0 %v1437, 32
        %v1448 = vpop.permute.xlu0 %1447
        %1449 = vrot.lane.b32.xlu0 %v1438, 32
        %v1450 = vpop.permute.xlu0 %1449
        %v1455 = vmul.f32 %v1328, %v1444
        %v1456 = vmul.f32 %v1330, %v1446
        %v1457 = vmul.f32 %v1332, %v1448
        %v1458 = vmul.f32 %v1334, %v1450
        %1463 = vrot.lane.b32.xlu0 %v1407, 96
        %v1464 = vpop.permute.xlu0 %1463
        %1465 = vrot.lane.b32.xlu0 %v1408, 96
        %v1466 = vpop.permute.xlu0 %1465
        %1467 = vrot.lane.b32.xlu0 %v1409, 96
        %v1468 = vpop.permute.xlu0 %1467
        %1469 = vrot.lane.b32.xlu0 %v1410, 96
        %v1470 = vpop.permute.xlu0 %1469
        %v1475 = vrot.slane %v1464, 6
        %v1476 = vrot.slane %v1466, 6
        %v1477 = vrot.slane %v1468, 6
        %v1478 = vrot.slane %v1470, 6
        %v1479 = vsel %vm754, %v1477, %v1478
        %v1480 = vsel %vm754, %v1476, %v1477
        %v1481 = vsel %vm754, %v1475, %v1476
        %v1482 = vsel %vm754, %v1478, %v1475
        %v1483 = vsel %vm759, %v1482, 0.0
        %v1484 = vsel %vm760, %v1481, 0.0
        %v1485 = vsel %vm759, %v1480, 0.0
        %v1486 = vsel %vm760, %v1479, 0.0
        %1491 = vrot.lane.b32.xlu0 %v1483, 32
        %v1492 = vpop.permute.xlu0 %1491
        %1493 = vrot.lane.b32.xlu0 %v1484, 32
        %v1494 = vpop.permute.xlu0 %1493
        %1495 = vrot.lane.b32.xlu0 %v1485, 32
        %v1496 = vpop.permute.xlu0 %1495
        %1497 = vrot.lane.b32.xlu0 %v1486, 32
        %v1498 = vpop.permute.xlu0 %1497
        %v1503 = vmul.f32 %v1455, %v1492
        %v1504 = vmul.f32 %v1456, %v1494
        %v1505 = vmul.f32 %v1457, %v1496
        %v1506 = vmul.f32 %v1458, %v1498
        %v1507 = vadd.f32 %v1503, %v1407
        %v1508 = vadd.f32 %v1504, %v1408
        %v1509 = vadd.f32 %v1505, %v1409
        %v1510 = vadd.f32 %v1506, %v1410
        %1515 = vrot.lane.b32.xlu0 %v1455, 96
        %v1516 = vpop.permute.xlu0 %1515
        %1517 = vrot.lane.b32.xlu0 %v1456, 96
        %v1518 = vpop.permute.xlu0 %1517
        %1519 = vrot.lane.b32.xlu0 %v1457, 96
        %v1520 = vpop.permute.xlu0 %1519
        %1521 = vrot.lane.b32.xlu0 %v1458, 96
        %v1522 = vpop.permute.xlu0 %1521
        %v1527 = vrot.slane %v1516, 6
        %v1528 = vrot.slane %v1518, 6
        %v1529 = vrot.slane %v1520, 6
        %v1530 = vrot.slane %v1522, 6
        %v1531 = vsel %vm754, %v1529, %v1530
        %v1532 = vsel %vm754, %v1528, %v1529
        %v1533 = vsel %vm754, %v1527, %v1528
        %v1534 = vsel %vm754, %v1530, %v1527
        %v1535 = vsel %vm759, %v1534, 1.0
        %v1536 = vsel %vm760, %v1533, 1.0
        %v1537 = vsel %vm759, %v1532, 1.0
        %v1538 = vsel %vm760, %v1531, 1.0
        %1543 = vrot.lane.b32.xlu0 %v1535, 32
        %v1544 = vpop.permute.xlu0 %1543
        %1545 = vrot.lane.b32.xlu0 %v1536, 32
        %v1546 = vpop.permute.xlu0 %1545
        %1547 = vrot.lane.b32.xlu0 %v1537, 32
        %v1548 = vpop.permute.xlu0 %1547
        %1549 = vrot.lane.b32.xlu0 %v1538, 32
        %v1550 = vpop.permute.xlu0 %1549
        %v1555 = vmul.f32 %v1455, %v1544
        %v1556 = vmul.f32 %v1456, %v1546
        %v1557 = vmul.f32 %v1457, %v1548
        %v1558 = vmul.f32 %v1458, %v1550
        %1563 = vrot.lane.b32.xlu0 %v1507, 96
        %v1564 = vpop.permute.xlu0 %1563
        %1565 = vrot.lane.b32.xlu0 %v1508, 96
        %v1566 = vpop.permute.xlu0 %1565
        %1567 = vrot.lane.b32.xlu0 %v1509, 96
        %v1568 = vpop.permute.xlu0 %1567
        %1569 = vrot.lane.b32.xlu0 %v1510, 96
        %v1570 = vpop.permute.xlu0 %1569
        %v1575 = vrot.slane %v1564, 4
        %v1576 = vrot.slane %v1566, 4
        %v1577 = vrot.slane %v1568, 4
        %v1578 = vrot.slane %v1570, 4
        %v1579 = vsel %vm857, %v1577, %v1578
        %v1580 = vsel %vm857, %v1576, %v1577
        %v1581 = vsel %vm857, %v1575, %v1576
        %v1582 = vsel %vm857, %v1578, %v1575
        %v1583 = vsel %vm862, %v1582, 0.0
        %v1584 = vsel %vm863, %v1581, 0.0
        %v1585 = vsel %vm862, %v1580, 0.0
        %v1586 = vsel %vm863, %v1579, 0.0
        %1591 = vrot.lane.b32.xlu0 %v1583, 32
        %v1592 = vpop.permute.xlu0 %1591
        %1593 = vrot.lane.b32.xlu0 %v1584, 32
        %v1594 = vpop.permute.xlu0 %1593
        %1595 = vrot.lane.b32.xlu0 %v1585, 32
        %v1596 = vpop.permute.xlu0 %1595
        %1597 = vrot.lane.b32.xlu0 %v1586, 32
        %v1598 = vpop.permute.xlu0 %1597
        %v1603 = vmul.f32 %v1555, %v1592
        %v1604 = vmul.f32 %v1556, %v1594
        %v1605 = vmul.f32 %v1557, %v1596
        %v1606 = vmul.f32 %v1558, %v1598
        %v1607 = vadd.f32 %v1603, %v1507
        %v1608 = vadd.f32 %v1604, %v1508
        %v1609 = vadd.f32 %v1605, %v1509
        %v1610 = vadd.f32 %v1606, %v1510
        %1615 = vrot.lane.b32.xlu0 %v1555, 96
        %v1616 = vpop.permute.xlu0 %1615
        %1617 = vrot.lane.b32.xlu0 %v1556, 96
        %v1618 = vpop.permute.xlu0 %1617
        %1619 = vrot.lane.b32.xlu0 %v1557, 96
        %v1620 = vpop.permute.xlu0 %1619
        %1621 = vrot.lane.b32.xlu0 %v1558, 96
        %v1622 = vpop.permute.xlu0 %1621
        %v1627 = vrot.slane %v1616, 4
        %v1628 = vrot.slane %v1618, 4
        %v1629 = vrot.slane %v1620, 4
        %v1630 = vrot.slane %v1622, 4
        %v1631 = vsel %vm857, %v1629, %v1630
        %v1632 = vsel %vm857, %v1628, %v1629
        %v1633 = vsel %vm857, %v1627, %v1628
        %v1634 = vsel %vm857, %v1630, %v1627
        %v1635 = vsel %vm862, %v1634, 1.0
        %v1636 = vsel %vm863, %v1633, 1.0
        %v1637 = vsel %vm862, %v1632, 1.0
        %v1638 = vsel %vm863, %v1631, 1.0
        %1643 = vrot.lane.b32.xlu0 %v1635, 32
        %v1644 = vpop.permute.xlu0 %1643
        %1645 = vrot.lane.b32.xlu0 %v1636, 32
        %v1646 = vpop.permute.xlu0 %1645
        %1647 = vrot.lane.b32.xlu0 %v1637, 32
        %v1648 = vpop.permute.xlu0 %1647
        %1649 = vrot.lane.b32.xlu0 %v1638, 32
        %v1650 = vpop.permute.xlu0 %1649
        %v1655 = vmul.f32 %v1555, %v1644
        %v1656 = vmul.f32 %v1556, %v1646
        %v1657 = vmul.f32 %v1557, %v1648
        %v1658 = vmul.f32 %v1558, %v1650
        %1661 = vrot.lane.b32.xlu0 %v1607, 96
        %v1662 = vpop.permute.xlu0 %1661
        %1663 = vrot.lane.b32.xlu0 %v1609, 96
        %v1664 = vpop.permute.xlu0 %1663
        %v1667 = vsel %vm957, %v1662, 0.0
        %v1668 = vsel %vm957, %v1664, 0.0
        %1671 = vrot.lane.b32.xlu0 %v1667, 32
        %v1672 = vpop.permute.xlu0 %1671
        %1673 = vrot.lane.b32.xlu0 %v1668, 32
        %v1674 = vpop.permute.xlu0 %1673
        %v1677 = vmul.f32 %v1656, %v1672
        %v1678 = vmul.f32 %v1658, %v1674
        %v1679 = vadd.f32 %v1677, %v1608
        %v1680 = vadd.f32 %v1678, %v1610
        %1683 = vrot.lane.b32.xlu0 %v1655, 96
        %v1684 = vpop.permute.xlu0 %1683
        %1685 = vrot.lane.b32.xlu0 %v1657, 96
        %v1686 = vpop.permute.xlu0 %1685
        %v1689 = vsel %vm957, %v1684, 1.0
        %v1690 = vsel %vm957, %v1686, 1.0
        %1693 = vrot.lane.b32.xlu0 %v1689, 32
        %v1694 = vpop.permute.xlu0 %1693
        %1695 = vrot.lane.b32.xlu0 %v1690, 32
        %v1696 = vpop.permute.xlu0 %1695
        %v1699 = vmul.f32 %v1656, %v1694
        %v1700 = vmul.f32 %v1658, %v1696
        %v1701 = vld [vmem:[#allocation5] sm:$0x1]
        %v1702 = vld [vmem:[#allocation5 + $0x1] sm:$0x1]
        %v1705 = vlaneseq
        %v1706 = vshrl.u32 %v1705, 7
        %v1707 = vsub.s32 0, %v1706
        %v1708 = vrot.slane %v1701, %v1707
        %v1709 = vlaneseq
        %v1710 = vshrl.u32 %v1709, 7
        %v1711 = vsub.s32 0, %v1710
        %v1712 = vrot.slane %v1702, %v1711
        %1713 = vrot.lane.b32.xlu0 %v1708, 32
        %v1714 = vpop.permute.xlu0 %1713
        %1715 = vrot.lane.b32.xlu0 %v1712, 32
        %v1716 = vpop.permute.xlu0 %1715
        %v1719 = vmul.f32 %v1699, %v1714
        %v1720 = vmul.f32 %v1700, %v1716
        %v1721 = vadd.f32 %v1719, %v1679
        %v1722 = vadd.f32 %v1720, %v1680
        %1725 = vrot.lane.b32.xlu0 %v1721, 96
        %v1726 = vpop.permute.xlu0 %1725
        %1727 = vrot.lane.b32.xlu0 %v1722, 96
        %v1728 = vpop.permute.xlu0 %1727
        %1731 = vst.msk [vmem:[#allocation5 - $0x7] sm:$0x80] %vm395, %v1726
        %1732 = vst.msk [vmem:[#allocation5 - $0x6] sm:$0x80] %vm395, %v1728
        %1733 = vrot.lane.b32.xlu0 %v1721, 32
        %v1734 = vpop.permute.xlu0 %1733
        %1735 = vrot.lane.b32.xlu0 %v1722, 32
        %v1736 = vpop.permute.xlu0 %1735
        %v1739 = vmul.f32 %v1330, %v1734
        %v1740 = vmul.f32 %v1334, %v1736
        %p1741 = scmp.eq.s32.totalorder %s26, 3
        // Predicated region
        $region98: #{tpu_custom_call.1} parent=84 // pred_check
          %p1742 = pneg %p1741
        $region99: #{tpu_custom_call.1} parent=84 // pred_check_branch
          %1744 = sbr.rel (%p1742) target = $region101
        $region100: #{tpu_custom_call.1} parent=84 // pred_region
          %v1745 = vpack.c.bf16 %v1739, %v1739
          %v1746 = vpack.c.bf16 %v1740, %v1740
          %v1747 = vld [vmem:[%s5] sm:$0xf]
          %v1748 = vld [vmem:[%s5 + $0x4] sm:$0xf]
          %v1749 = vld [vmem:[%s5 + $0x8] sm:$0xf]
          %v1750 = vld [vmem:[%s5 + $0xc] sm:$0xf]
          %v1751 = vld [vmem:[%s6] sm:$0x1]
          %v1753 = vlaneseq
          %v1754 = vshrl.u32 %v1753, 7
          %v1755 = vsub.s32 0, %v1754
          %v1756 = vrot.slane %v1751, %v1755
          %v1760 = vunpack.c.l.b16 %v1745
          %v1761 = vunpack.c.l.b16 %v1746
          %v1762 = vrot.slane %v1760, 7
          %v1763 = vrot.slane %v1761, 6
          %vm1764 = vcmask 1041409
          %v1765 = vsel %vm1764, %v1763, %v1762
          %v1766 = vpack.c.b16 %v1765, %v1765
          %1767 = vrot.lane.b32.xlu0 %v1766, 64
          %v1768 = vpop.permute.xlu0 %1767
          %v1773 = vunpack.c.l.b16 %v1747
          %v1774 = vunpack.c.l.b16 %v1748
          %v1775 = vunpack.c.l.b16 %v1749
          %v1776 = vunpack.c.l.b16 %v1750
          %v1777 = vpack.c.b16 %v1774, %v1773
          %v1778 = vpack.c.b16 %v1776, %v1775
          %v1782 = vsel %vm447, %v1768, 0
          %1784 = vmatprep.subr.bf16.mxu0 0
          %1785 = vmatpush1.bf16.msra.mxu0 0
          %1786 = vmatprep.subr.bf16.mxu0 0
          %1787 = vmatpush1.bf16.msra.mxu0 0
          %1788 = vmatprep.subr.bf16.mxu0 0
          %1789 = vmatpush1.bf16.msra.mxu0 0
          %1790 = vmatprep.subr.bf16.mxu0 0
          %1791 = vmatpush1.bf16.msra.mxu0 0
          %1792 = vmatprep.subr.bf16.mxu0 0
          %1793 = vmatpush1.bf16.msra.mxu0 0
          %1794 = vmatprep.subr.bf16.mxu0 0
          %1795 = vmatpush1.bf16.msra.mxu0 0
          %1796 = vmatprep.subr.bf16.mxu0 0
          %1797 = vmatpush1.bf16.msra.mxu0 %v1778
          %1798 = vmatprep.subr.bf16.mxu0 0
          %1799 = vmatpush1.bf16.msra.mxu0 %v1777
          %1800 = vmatprep.subr.bf16.mxu0 0
          %1801 = vmatpush2.bf16.msra.mxu0 0
          %1802 = vmatprep.subr.bf16.mxu0 0
          %1803 = vmatpush2.bf16.msra.mxu0 0
          %1804 = vmatprep.subr.bf16.mxu0 0
          %1805 = vmatpush2.bf16.msra.mxu0 0
          %1806 = vmatprep.subr.bf16.mxu0 0
          %1807 = vmatpush2.bf16.msra.mxu0 0
          %1808 = vmatprep.subr.bf16.mxu0 0
          %1809 = vmatpush2.bf16.msra.mxu0 0
          %1810 = vmatprep.subr.bf16.mxu0 0
          %1811 = vmatpush2.bf16.msra.mxu0 0
          %1812 = vmatprep.subr.bf16.mxu0 0
          %1813 = vmatpush2.bf16.msra.mxu0 0
          %1814 = vmatprep.subr.bf16.mxu0 0
          %1815 = vmatpush2.bf16.msra.mxu0 0
          %1816 = vmatprep.mubr.bf16.mxu0 0
          %1817 = vmatmul.mubr.bf16.gmra.mxu0 %v1782
          %v1818 = vpop.f32.mrf.mxu0
          %v1819 = vadd.f32 %v1756, %v1818
          %v1820 = vpop.f32.mrf.mxu0
          %v1821 = vpop.f32.mrf.mxu0
          %v1822 = vpop.f32.mrf.mxu0
          %1823 = vdwg.mxu0
          %v1826 = vunpack.c.l.s4 1966171168
          %v1827 = vunpack.c.0.s8 %v1826
          %v1828 = vlaneseq
          %v1829 = vshrl.u32 %v1828, 7
          %v1830 = vsub.s32 %v1827, %v1829
          %v1831 = vrot.slane %v1819, %v1830
          %v1832 = vcombine.high %v1831, %v1831
          %v1834 = vunpack.c.l.s4 1966171168
          %v1835 = vunpack.c.0.s8 %v1834
          %v1836 = vlaneseq
          %v1837 = vshrl.u32 %v1836, 7
          %v1838 = vsub.s32 %v1835, %v1837
          %v1839 = vrot.slane %v1831, %v1838
          %v1841 = vunpack.c.l.s4 1966171168
          %v1842 = vunpack.c.0.s8 %v1841
          %v1843 = vlaneseq
          %v1844 = vshrl.u32 %v1843, 7
          %v1845 = vsub.s32 %v1842, %v1844
          %v1846 = vrot.slane %v1832, %v1845
          %vm1849 = vcmask 32768
          %1850 = vst.msk [vmem:[%s349] sm:$0x1] %vm1849, %v1839
          %1851 = vst.msk [vmem:[%s349 + $0x1] sm:$0x1] %vm1849, %v1846
        $region101: #{tpu_custom_call.1} parent=84 // pred_fallthru
          _
        %s1852 = sand.u32 %s195, 1
        %s1853 = scalar_lea.sflag [#allocation8], %s1852
        %s1854 = sand.u32 %s195, 1
        %s1855 = smul.addr %s1854, 2
        %s1856 = scalar_lea.vmem [#allocation7], %s1855
        // Predicated region
        $region102: #{tpu_custom_call.1} parent=84 // pred_check
          %p1857 = pneg %p205
        $region103: #{tpu_custom_call.1} parent=84 // pred_check_branch
          %1859 = sbr.rel (%p1857) target = $region105
        $region104: #{tpu_custom_call.1} parent=84 // pred_region
          %s1860 = smul.u32 2, %s25
          %s1862 = ssub.s32 32, 32
          %1863 = vsyncadd %s1853, %s1862
          %s1864 = smul.addr %s1860, 16
          %s1865 = scalar_lea.hbm %s7, %s1864
          %s1866 = sshll.u32 %s1856, 4
          %s1867 = int_to_ptr.vmem [resolvable:$true] %s1866
          %1872 = dma.vmem_to_hbm [thread:$0]  %s1867, 32, %s1865, %s1853, 16, 16, 1
        $region105: #{tpu_custom_call.1} parent=84 // pred_fallthru
          _
      $region85: #{tpu_custom_call.1} parent=5 // pred_fallthru
        _
      %p1873 = scmp.le.s32.totalorder 2, %s16
      // Predicated region
      $region106: #{tpu_custom_call.1} parent=5 // pred_check
        %p1874 = pneg %p1873
      $region107: #{tpu_custom_call.1} parent=5 // pred_check_branch
        %1876 = sbr.rel (%p1874) target = $region109
      $region108: #{tpu_custom_call.1} parent=5 // pred_region
        %s1877 = ssub.s32 %s16, 2
        // Predicated region
        $region110: #{tpu_custom_call.1} parent=108 // pred_check
          %p1878 = pneg %p211
        $region111: #{tpu_custom_call.1} parent=108 // pred_check_branch
          %1880 = sbr.rel (%p1878) target = $region113
        $region112: #{tpu_custom_call.1} parent=108 // pred_region
          %s1881 = sand.u32 %s196, 1
          %s1882 = scalar_lea.sflag [#allocation8], %s1881
          %s1883 = sand.u32 %s196, 1
          %s1884 = smul.addr %s1883, 2
          %s1885 = scalar_lea.vmem [#allocation7], %s1884
          %1886 = dma.done %s1882, 32
        $region113: #{tpu_custom_call.1} parent=108 // pred_fallthru
          _
      $region109: #{tpu_custom_call.1} parent=5 // pred_fallthru
        _
    $region6: #{tpu_custom_call.1} parent=1 // loop_footer
      %s20 = sadd.s32 1, %s16
    $region7: #{tpu_custom_call.1} parent=1 // loop_footer_branch
      %15 = sbr.rel target = $region3
    $region8: #{tpu_custom_call.1} parent=1 // loop_exit
      _
    %1887 = vsyncpa [#allocation8], 1
    %s1888 = scalar_lea.sflag [#allocation8], 1
    %1889 = vsyncpa %s1888, 1

</llo_original>
